<compile_context>
chip_gen: v6e
topology: v6e:2x2x1
jax: 0.10.0
libtpu: 0.0.40
codegen_flags: <defaults>
</compile_context>

<pallas_src>
import functools

import jax
import jax.numpy as jnp
from jax import lax
from jax.experimental import pallas as pl
from jax.experimental.pallas import tpu as pltpu


# tap order t = kh*3 + kw, with (dh, dw) = (kh-1, kw-1)
_TAP_OFFSETS = tuple((dh, dw) for dh in (-1, 0, 1) for dw in (-1, 0, 1))


def _round_up(v, m):
    return (v + m - 1) // m * m


# ----------------------------- Pallas kernel ------------------------------ #
def _dw_block_kernel(*refs, H, W, bblk, depthwise, has_sel, sel_before, mm_dtype):
    """One grid step = `bblk` images as one lane-dense (bblk*Cin, H*W) slab.

    inputs : x    (bblk*Cin, HW)        input dtype (f32)
             mask (9, HW)               f32 zero-padding validity per tap
             w1   (bblk*Cin, 9)  f32    if depthwise (per-channel tap weights)
                  (9, Cin, Cin)  mm     otherwise (block-diagonal over groups)
             sh1  (bblk*Cin,1)/(Cin,1)  f32 folded conv1-bias + BN1
             w2   (Cout, Cin)    mm     folded 1x1 weight
             sh2  (Cout, 1)      f32    folded conv2-bias + BN2
             sel  (HW, OUTW)     mm     only if stride > 1 (0/1, lane-padded)
    output : o    (bblk*Cout, OUTW)     f32
    """
    if has_sel:
        x_ref, m_ref, w1_ref, sh1_ref, w2_ref, sh2_ref, sel_ref, o_ref = refs
    else:
        x_ref, m_ref, w1_ref, sh1_ref, w2_ref, sh2_ref, o_ref = refs
        sel_ref = None

    HW = H * W
    Cout = w2_ref.shape[0]
    Cin = w2_ref.shape[1]

    slab = x_ref[...]                     # (bblk*Cin, HW): whole grid block
    mk = m_ref[...]                       # (9, HW) f32 host-precomputed masks

    # 9 masked, shifted tap slabs — ONE roll + mask per tap for the whole block
    # (not per image); zero padding realized by roll + boundary mask.
    taps = []
    for t, (dh, dw) in enumerate(_TAP_OFFSETS):
        off = dh * W + dw
        sh = slab if off == 0 else pltpu.roll(slab, (-off) % HW, axis=1)
        m = sh * mk[t:t + 1, :]
        taps.append(m if depthwise else m.astype(mm_dtype))

    # constant operands: loaded once per grid step, hoisted out of all loops.
    sh1v = sh1_ref[...]
    w2v = w2_ref[...]
    sh2v = sh2_ref[...]
    selv = sel_ref[...] if sel_ref is not None else None

    if depthwise:
        # true depthwise conv on the VPU, vectorized over the whole slab (f32).
        # TODO(synk): on v6e/v7x this could run in bf16 or on the (idle) MXU.
        w1v = w1_ref[...]                 # (bblk*Cin, 9) f32, loaded once
        h_all = taps[0] * w1v[:, 0:1]
        for t in range(1, 9):
            h_all = h_all + taps[t] * w1v[:, t:t + 1]
        h_all = jnp.maximum(h_all + sh1v, 0.0)        # folded bias+BN1, ReLU
        w1_taps = None
    else:
        w1_taps = [w1_ref[t] for t in range(9)]       # 9 x (Cin, Cin), hoisted
        h_all = None

    for b in range(bblk):                 # bblk small; only the matmuls are per image
        if depthwise:
            h = h_all[b * Cin:(b + 1) * Cin, :]
        else:
            # conv1 as 9 accumulating MXU matmuls (no im2col scratch round trip).
            h = jnp.dot(w1_taps[0], taps[0][b * Cin:(b + 1) * Cin, :],
                        preferred_element_type=jnp.float32)
            for t in range(1, 9):
                h = h + jnp.dot(w1_taps[t], taps[t][b * Cin:(b + 1) * Cin, :],
                                preferred_element_type=jnp.float32)
            h = jnp.maximum(h + sh1v, 0.0)            # folded bias+BN1, ReLU

        if selv is not None and sel_before:
            # stride>1: pick strided output columns (exact 0/1, lane-padded cols)
            h = jnp.dot(h.astype(mm_dtype), selv, preferred_element_type=jnp.float32)

        # 1x1 conv (conv2) + folded (bias + BN2).
        y = jnp.dot(w2v, h.astype(mm_dtype), preferred_element_type=jnp.float32) + sh2v

        if selv is not None and not sel_before:
            y = jnp.dot(y.astype(mm_dtype), selv, preferred_element_type=jnp.float32)

        o_ref[b * Cout:(b + 1) * Cout, :] = y.astype(o_ref.dtype)


# ------------------------------ JAX wrapper -------------------------------- #
def _pick_batch_block(n, max_block=8):
    """Largest divisor of n (<= max_block) leaving >=2 grid steps, preferring an
    even step count so the two v7x TensorCores get equal work."""
    best, best_key = 1, (-1, -1)
    for d in range(1, min(n, max_block) + 1):
        if n % d:
            continue
        steps = n // d
        if steps < 2 and n >= 2:
            continue
        key = (1 if steps % 2 == 0 else 0, d)
        if key > best_key:
            best, best_key = d, key
    return best


def depthwise_block_forward(x_nchw, params, *, stride=1, groups=1, eps=1e-5,
                            mm_dtype=jnp.bfloat16, block_n=None):
    """Exact forward of the PyTorch depthwise_block (inference-mode BatchNorm).

    mm_dtype controls MXU operand precision (bf16 default; accumulation is f32).
    """
    N, Cin, H, W = x_nchw.shape
    Cout = params["w2"].shape[0]
    assert Cin % groups == 0
    HW = H * W
    Ho = (H + 2 - 3) // stride + 1
    Wo = (W + 2 - 3) // stride + 1
    HoWo = Ho * Wo
    depthwise = (groups == Cin)
    has_sel = stride > 1
    sel_before = Cin <= Cout              # apply selection where there are fewer rows
    OUTW = HW if not has_sel else _round_up(HoWo, 128)   # lane-dense output slab

    # ---- batch blocking: amortize ~0.35us/step, keep >=2 (preferably even) steps
    bblk = _pick_batch_block(N) if block_n is None else block_n
    assert N % bblk == 0, "block_n must divide the batch size"
    G = N // bblk

    # ---- fold conv biases + inference BN into weights / per-channel shifts ----
    s1 = (params["g1"] / jnp.sqrt(params["v1"] + eps)).astype(jnp.float32)
    sh1 = (params["b1"] * s1 + params["be1"] - params["m1"] * s1)
    sh1 = sh1.reshape(Cin, 1).astype(jnp.float32)
    s2 = (params["g2"] / jnp.sqrt(params["v2"] + eps)).astype(jnp.float32)
    sh2 = (params["b2"] * s2 + params["be2"] - params["m2"] * s2)
    sh2 = sh2.reshape(Cout, 1).astype(jnp.float32)

    w1p = params["w1"].astype(jnp.float32) * s1[:, None, None, None]  # (Cin,Cin//g,3,3)
    if depthwise:
        # (bblk*Cin, 9) f32: per-(image, channel) tap weights for the VPU path.
        w1_k = jnp.tile(w1p[:, 0].reshape(Cin, 9), (bblk, 1))
        sh1_k = jnp.tile(sh1, (bblk, 1))
    else:
        # (9, Cin, Cin) mm_dtype, block-diagonal over groups: W1_t = w1[:, :, kh, kw].
        cpg = Cin // groups
        w1_full = jnp.zeros((Cin, Cin, 3, 3), jnp.float32)
        for g in range(groups):
            w1_full = w1_full.at[g * cpg:(g + 1) * cpg,
                                 g * cpg:(g + 1) * cpg, :, :].set(
                w1p[g * cpg:(g + 1) * cpg])
        w1_k = jnp.transpose(w1_full, (2, 3, 0, 1)).reshape(9, Cin, Cin).astype(mm_dtype)
        sh1_k = sh1

    w2_k = (params["w2"][:, :, 0, 0].astype(jnp.float32) * s2[:, None]).astype(mm_dtype)

    # ---- host-precomputed zero-padding masks (9, HW): not rebuilt per grid step
    lane = jnp.arange(HW, dtype=jnp.int32)
    row, col = lane // W, lane % W
    masks = jnp.stack(
        [((row + dh >= 0) & (row + dh < H) & (col + dw >= 0) & (col + dw < W))
         for (dh, dw) in _TAP_OFFSETS], axis=0).astype(jnp.float32)

    # ---- input: NCHW -> (G, bblk*Cin, H*W): free contiguous reshape, native dtype
    x = x_nchw.reshape(G, bblk * Cin, HW)

    # ---- stride>1: 0/1 selection matrix (mm_dtype, columns padded to OUTW) ----
    extra = []
    if has_sel:
        in_idx = (stride * jnp.arange(Ho))[:, None] * W + stride * jnp.arange(Wo)[None, :]
        sel = jnp.zeros((HW, OUTW), jnp.float32)
        sel = sel.at[in_idx.reshape(-1), jnp.arange(HoWo)].set(1.0)
        extra = [sel.astype(mm_dtype)]

    kernel = functools.partial(_dw_block_kernel, H=H, W=W, bblk=bblk,
                               depthwise=depthwise, has_sel=has_sel,
                               sel_before=sel_before, mm_dtype=mm_dtype)

    def _const(a):
        # whole-array constant operand (weights / shifts / masks / selection).
        nd = a.ndim
        return pl.BlockSpec(a.shape, lambda n, _nd=nd: (0,) * _nd)

    in_specs = ([pl.BlockSpec((None, bblk * Cin, HW), lambda n: (n, 0, 0)),
                 _const(masks), _const(w1_k), _const(sh1_k), _const(w2_k),
                 _const(sh2)] + [_const(e) for e in extra])

    # advisory cost estimate so XLA schedules around the custom call sensibly
    conv1_flops = 2 * 9 * Cin * (Cin // groups) * HW
    pw_flops = 2 * Cout * Cin * (OUTW if (has_sel and sel_before) else HW)
    sel_flops = 2 * min(Cin, Cout) * HW * OUTW if has_sel else 0
    bytes_accessed = (int(x.size) * x.dtype.itemsize + N * Cout * OUTW * 4
                      + sum(int(a.size) * a.dtype.itemsize
                            for a in [masks, w1_k, sh1_k, w2_k, sh2] + extra))
    cost = pl.CostEstimate(flops=N * (conv1_flops + pw_flops + sel_flops),
                           transcendentals=0, bytes_accessed=int(bytes_accessed))

    out = pl.pallas_call(
        kernel,
        out_shape=jax.ShapeDtypeStruct((G, bblk * Cout, OUTW), jnp.float32),
        grid_spec=pltpu.PrefetchScalarGridSpec(
            num_scalar_prefetch=0,
            grid=(G,),
            in_specs=in_specs,
            out_specs=pl.BlockSpec((None, bblk * Cout, OUTW), lambda n: (n, 0, 0)),
            scratch_shapes=[],
        ),
        compiler_params=pltpu.CompilerParams(
            dimension_semantics=("parallel",),
            # above the 16/32 MiB default scoped limits, below v7x's 64 MiB physical
            vmem_limit_bytes=48 * 1024 * 1024,
        ),
        cost_estimate=cost,
    )(x, masks, w1_k, sh1_k, w2_k, sh2, *extra)

    # (G, bblk*Cout, OUTW) -> NCHW: contiguous reshape + (lane-)pad slice.
    return out.reshape(N, Cout, OUTW)[:, :, :HoWo].reshape(N, Cout, Ho, Wo)


# --------------------------- pure-JAX reference ---------------------------- #
def _reference_forward(x, p, *, stride, groups, eps=1e-5):
    bn = lambda y, g, b, m, v: ((y - m[None, :, None, None])
                                * (g / jnp.sqrt(v + eps))[None, :, None, None]
                                + b[None, :, None, None])
    y = lax.conv_general_dilated(x, p["w1"], (stride, stride), ((1, 1), (1, 1)),
                                 dimension_numbers=("NCHW", "OIHW", "NCHW"),
                                 feature_group_count=groups)
    y = y + p["b1"][None, :, None, None]
    y = jnp.maximum(bn(y, p["g1"], p["be1"], p["m1"], p["v1"]), 0.0)
    y = lax.conv_general_dilated(y, p["w2"], (1, 1), ((0, 0), (0, 0)),
                                 dimension_numbers=("NCHW", "OIHW", "NCHW"))
    y = y + p["b2"][None, :, None, None]
    return bn(y, p["g2"], p["be2"], p["m2"], p["v2"])


def _make_params(key, cin, cout, groups):
    ks = jax.random.split(key, 12)
    n = lambda k, s, sc=0.1: sc * jax.random.normal(k, s, jnp.float32)
    u = lambda k, s: jax.random.uniform(k, s, jnp.float32, 0.5, 1.5)
    return {
        "w1": n(ks[0], (cin, cin // groups, 3, 3), 0.3),
        "b1": n(ks[1], (cin,)),
        "g1": u(ks[2], (cin,)), "be1": n(ks[3], (cin,)),
        "m1": n(ks[4], (cin,)), "v1": u(ks[5], (cin,)),
        "w2": n(ks[6], (cout, cin, 1, 1), 0.3),
        "b2": n(ks[7], (cout,)),
        "g2": u(ks[8], (cout,)), "be2": n(ks[9], (cout,)),
        "m2": n(ks[10], (cout,)), "v2": u(ks[11], (cout,)),
    }


# ---------------------------------- main ----------------------------------- #
if __name__ == "__main__":
    key = jax.random.PRNGKey(0)
    kx, kp1, kp2, kp3, kp4 = jax.random.split(key, 5)

    N, Cin, Cout, H, W = 2, 4, 8, 16, 16
    x = jax.random.normal(kx, (N, Cin, H, W), jnp.float32)

    p1 = _make_params(kp1, Cin, Cout, groups=1)
    p2 = _make_params(kp2, Cin, Cout, groups=Cin)
    p3 = _make_params(kp3, Cin, Cout, groups=2)
    p4 = _make_params(kp4, Cin, 2, groups=1)       # Cout < Cin: selection-after-1x1 path

    def _check(name, y, r, rtol, atol):
        assert y.shape == r.shape, f"{name}: shape {y.shape} vs {r.shape}"
        err = jnp.max(jnp.abs(y - r))
        assert jnp.allclose(y, r, rtol=rtol, atol=atol), f"{name}: max abs err {err}"

    # ---- exact (f32 MXU operands) checks of every structural path ----
    r1 = _reference_forward(x, p1, stride=1, groups=1)
    y = depthwise_block_forward(x, p1, stride=1, groups=1, mm_dtype=jnp.float32)
    jax.block_until_ready(y); _check("groups=1 f32", y, r1, 1e-4, 1e-4)

    r2 = _reference_forward(x, p2, stride=1, groups=Cin)
    y = depthwise_block_forward(x, p2, stride=1, groups=Cin, mm_dtype=jnp.float32)
    jax.block_until_ready(y); _check("depthwise f32", y, r2, 1e-4, 1e-4)

    r3 = _reference_forward(x, p3, stride=1, groups=2)
    y = depthwise_block_forward(x, p3, stride=1, groups=2, mm_dtype=jnp.float32)
    jax.block_until_ready(y); _check("grouped f32", y, r3, 1e-4, 1e-4)

    r4 = _reference_forward(x, p1, stride=2, groups=1)
    y = depthwise_block_forward(x, p1, stride=2, groups=1, mm_dtype=jnp.float32)
    jax.block_until_ready(y); _check("stride=2 f32", y, r4, 1e-4, 1e-4)

    r5 = _reference_forward(x, p4, stride=2, groups=1)
    y = depthwise_block_forward(x, p4, stride=2, groups=1, mm_dtype=jnp.float32)
    jax.block_until_ready(y); _check("stride=2 Cout<Cin f32", y, r5, 1e-4, 1e-4)

    # ---- default bf16 MXU operands (f32 accumulation): looser tolerance ----
    y = depthwise_block_forward(x, p1, stride=1, groups=1)
    jax.block_until_ready(y); _check("groups=1 bf16", y, r1, 5e-2, 1.5e-1)

    r6 = _reference_forward(x, p2, stride=2, groups=Cin)
    y = depthwise_block_forward(x, p2, stride=2, groups=Cin)
    jax.block_until_ready(y); _check("depthwise stride=2 bf16", y, r6, 5e-2, 1.5e-1)

    print("KERNEL_OK")
</pallas_src>

<mosaic_0001>
module attributes {stable_mosaic.version = 11 : i64} {
  func.func @_dw_block_kernel(%arg0: i32, %arg1: memref<1x4x256xf32, #tpu.memory_space<vmem>>, %arg2: memref<9x256xf32, #tpu.memory_space<vmem>>, %arg3: memref<9x4x4xf32, #tpu.memory_space<vmem>>, %arg4: memref<4x1xf32, #tpu.memory_space<vmem>>, %arg5: memref<8x4xf32, #tpu.memory_space<vmem>>, %arg6: memref<8x1xf32, #tpu.memory_space<vmem>>, %arg7: memref<1x8x256xf32, #tpu.memory_space<vmem>>) attributes {dimension_semantics = [#tpu.dimension_semantics<parallel>], iteration_bounds = array<i64: 2>, scalar_prefetch = 0 : i64, scratch_operands = 0 : i64, tpu.core_type = #tpu.core_type<tc>, window_params = [{transform_indices = @transform_0, window_bounds = array<i64: 1, 4, 256>}, {pipeline_mode = #tpu.pipeline_mode<synchronous>, transform_indices = @transform_1, window_bounds = array<i64: 9, 256>}, {pipeline_mode = #tpu.pipeline_mode<synchronous>, transform_indices = @transform_2, window_bounds = array<i64: 9, 4, 4>}, {pipeline_mode = #tpu.pipeline_mode<synchronous>, transform_indices = @transform_3, window_bounds = array<i64: 4, 1>}, {pipeline_mode = #tpu.pipeline_mode<synchronous>, transform_indices = @transform_4, window_bounds = array<i64: 8, 4>}, {pipeline_mode = #tpu.pipeline_mode<synchronous>, transform_indices = @transform_5, window_bounds = array<i64: 8, 1>}, {transform_indices = @transform_6, window_bounds = array<i64: 1, 8, 256>}]} {
    %c0 = arith.constant 0 : index
    %c0_0 = arith.constant 0 : index
    %c0_1 = arith.constant 0 : index
    %0 = vector.load %arg1[%c0, %c0_0, %c0_1] : memref<1x4x256xf32, #tpu.memory_space<vmem>>, vector<1x4x256xf32>
    %1 = vector.shape_cast %0 : vector<1x4x256xf32> to vector<4x256xf32>
    %c0_2 = arith.constant 0 : index
    %c0_3 = arith.constant 0 : index
    %2 = vector.load %arg2[%c0_2, %c0_3] : memref<9x256xf32, #tpu.memory_space<vmem>>, vector<9x256xf32>
    %c17_i32 = arith.constant 17 : i32
    %3 = tpu.dynamic_rotate %1 by %c17_i32 dim 1 : vector<4x256xf32>, i32 -> vector<4x256xf32>
    %4 = vector.extract_strided_slice %2 {offsets = [0, 0], sizes = [1, 256], strides = [1, 1]} : vector<9x256xf32> to vector<1x256xf32>
    %5 = vector.broadcast %4 : vector<1x256xf32> to vector<4x256xf32>
    %6 = arith.mulf %3, %5 : vector<4x256xf32>
    %c16_i32 = arith.constant 16 : i32
    %7 = tpu.dynamic_rotate %1 by %c16_i32 dim 1 : vector<4x256xf32>, i32 -> vector<4x256xf32>
    %8 = vector.extract_strided_slice %2 {offsets = [1, 0], sizes = [1, 256], strides = [1, 1]} : vector<9x256xf32> to vector<1x256xf32>
    %9 = vector.broadcast %8 : vector<1x256xf32> to vector<4x256xf32>
    %10 = arith.mulf %7, %9 : vector<4x256xf32>
    %c15_i32 = arith.constant 15 : i32
    %11 = tpu.dynamic_rotate %1 by %c15_i32 dim 1 : vector<4x256xf32>, i32 -> vector<4x256xf32>
    %12 = vector.extract_strided_slice %2 {offsets = [2, 0], sizes = [1, 256], strides = [1, 1]} : vector<9x256xf32> to vector<1x256xf32>
    %13 = vector.broadcast %12 : vector<1x256xf32> to vector<4x256xf32>
    %14 = arith.mulf %11, %13 : vector<4x256xf32>
    %c1_i32 = arith.constant 1 : i32
    %15 = tpu.dynamic_rotate %1 by %c1_i32 dim 1 : vector<4x256xf32>, i32 -> vector<4x256xf32>
    %16 = vector.extract_strided_slice %2 {offsets = [3, 0], sizes = [1, 256], strides = [1, 1]} : vector<9x256xf32> to vector<1x256xf32>
    %17 = vector.broadcast %16 : vector<1x256xf32> to vector<4x256xf32>
    %18 = arith.mulf %15, %17 : vector<4x256xf32>
    %19 = vector.extract_strided_slice %2 {offsets = [4, 0], sizes = [1, 256], strides = [1, 1]} : vector<9x256xf32> to vector<1x256xf32>
    %20 = vector.broadcast %19 : vector<1x256xf32> to vector<4x256xf32>
    %21 = arith.mulf %1, %20 : vector<4x256xf32>
    %c255_i32 = arith.constant 255 : i32
    %22 = tpu.dynamic_rotate %1 by %c255_i32 dim 1 : vector<4x256xf32>, i32 -> vector<4x256xf32>
    %23 = vector.extract_strided_slice %2 {offsets = [5, 0], sizes = [1, 256], strides = [1, 1]} : vector<9x256xf32> to vector<1x256xf32>
    %24 = vector.broadcast %23 : vector<1x256xf32> to vector<4x256xf32>
    %25 = arith.mulf %22, %24 : vector<4x256xf32>
    %c241_i32 = arith.constant 241 : i32
    %26 = tpu.dynamic_rotate %1 by %c241_i32 dim 1 : vector<4x256xf32>, i32 -> vector<4x256xf32>
    %27 = vector.extract_strided_slice %2 {offsets = [6, 0], sizes = [1, 256], strides = [1, 1]} : vector<9x256xf32> to vector<1x256xf32>
    %28 = vector.broadcast %27 : vector<1x256xf32> to vector<4x256xf32>
    %29 = arith.mulf %26, %28 : vector<4x256xf32>
    %c240_i32 = arith.constant 240 : i32
    %30 = tpu.dynamic_rotate %1 by %c240_i32 dim 1 : vector<4x256xf32>, i32 -> vector<4x256xf32>
    %31 = vector.extract_strided_slice %2 {offsets = [7, 0], sizes = [1, 256], strides = [1, 1]} : vector<9x256xf32> to vector<1x256xf32>
    %32 = vector.broadcast %31 : vector<1x256xf32> to vector<4x256xf32>
    %33 = arith.mulf %30, %32 : vector<4x256xf32>
    %c239_i32 = arith.constant 239 : i32
    %34 = tpu.dynamic_rotate %1 by %c239_i32 dim 1 : vector<4x256xf32>, i32 -> vector<4x256xf32>
    %35 = vector.extract_strided_slice %2 {offsets = [8, 0], sizes = [1, 256], strides = [1, 1]} : vector<9x256xf32> to vector<1x256xf32>
    %36 = vector.broadcast %35 : vector<1x256xf32> to vector<4x256xf32>
    %37 = arith.mulf %34, %36 : vector<4x256xf32>
    %c0_4 = arith.constant 0 : index
    %c0_5 = arith.constant 0 : index
    %38 = vector.load %arg4[%c0_4, %c0_5] : memref<4x1xf32, #tpu.memory_space<vmem>>, vector<4x1xf32>
    %c0_6 = arith.constant 0 : index
    %c0_7 = arith.constant 0 : index
    %39 = vector.load %arg5[%c0_6, %c0_7] : memref<8x4xf32, #tpu.memory_space<vmem>>, vector<8x4xf32>
    %c0_8 = arith.constant 0 : index
    %c0_9 = arith.constant 0 : index
    %40 = vector.load %arg6[%c0_8, %c0_9] : memref<8x1xf32, #tpu.memory_space<vmem>>, vector<8x1xf32>
    %c0_10 = arith.constant 0 : index
    %c0_11 = arith.constant 0 : index
    %c0_12 = arith.constant 0 : index
    %41 = vector.load %arg3[%c0_10, %c0_11, %c0_12] : memref<9x4x4xf32, #tpu.memory_space<vmem>>, vector<1x4x4xf32>
    %42 = vector.shape_cast %41 : vector<1x4x4xf32> to vector<4x4xf32>
    %c1 = arith.constant 1 : index
    %c0_13 = arith.constant 0 : index
    %c0_14 = arith.constant 0 : index
    %43 = vector.load %arg3[%c1, %c0_13, %c0_14] : memref<9x4x4xf32, #tpu.memory_space<vmem>>, vector<1x4x4xf32>
    %44 = vector.shape_cast %43 : vector<1x4x4xf32> to vector<4x4xf32>
    %c2 = arith.constant 2 : index
    %c0_15 = arith.constant 0 : index
    %c0_16 = arith.constant 0 : index
    %45 = vector.load %arg3[%c2, %c0_15, %c0_16] : memref<9x4x4xf32, #tpu.memory_space<vmem>>, vector<1x4x4xf32>
    %46 = vector.shape_cast %45 : vector<1x4x4xf32> to vector<4x4xf32>
    %c3 = arith.constant 3 : index
    %c0_17 = arith.constant 0 : index
    %c0_18 = arith.constant 0 : index
    %47 = vector.load %arg3[%c3, %c0_17, %c0_18] : memref<9x4x4xf32, #tpu.memory_space<vmem>>, vector<1x4x4xf32>
    %48 = vector.shape_cast %47 : vector<1x4x4xf32> to vector<4x4xf32>
    %c4 = arith.constant 4 : index
    %c0_19 = arith.constant 0 : index
    %c0_20 = arith.constant 0 : index
    %49 = vector.load %arg3[%c4, %c0_19, %c0_20] : memref<9x4x4xf32, #tpu.memory_space<vmem>>, vector<1x4x4xf32>
    %50 = vector.shape_cast %49 : vector<1x4x4xf32> to vector<4x4xf32>
    %c5 = arith.constant 5 : index
    %c0_21 = arith.constant 0 : index
    %c0_22 = arith.constant 0 : index
    %51 = vector.load %arg3[%c5, %c0_21, %c0_22] : memref<9x4x4xf32, #tpu.memory_space<vmem>>, vector<1x4x4xf32>
    %52 = vector.shape_cast %51 : vector<1x4x4xf32> to vector<4x4xf32>
    %c6 = arith.constant 6 : index
    %c0_23 = arith.constant 0 : index
    %c0_24 = arith.constant 0 : index
    %53 = vector.load %arg3[%c6, %c0_23, %c0_24] : memref<9x4x4xf32, #tpu.memory_space<vmem>>, vector<1x4x4xf32>
    %54 = vector.shape_cast %53 : vector<1x4x4xf32> to vector<4x4xf32>
    %c7 = arith.constant 7 : index
    %c0_25 = arith.constant 0 : index
    %c0_26 = arith.constant 0 : index
    %55 = vector.load %arg3[%c7, %c0_25, %c0_26] : memref<9x4x4xf32, #tpu.memory_space<vmem>>, vector<1x4x4xf32>
    %56 = vector.shape_cast %55 : vector<1x4x4xf32> to vector<4x4xf32>
    %c8 = arith.constant 8 : index
    %c0_27 = arith.constant 0 : index
    %c0_28 = arith.constant 0 : index
    %57 = vector.load %arg3[%c8, %c0_27, %c0_28] : memref<9x4x4xf32, #tpu.memory_space<vmem>>, vector<1x4x4xf32>
    %58 = vector.shape_cast %57 : vector<1x4x4xf32> to vector<4x4xf32>
    %cst = arith.constant dense<0.000000e+00> : vector<4x256xf32>
    %59 = tpu.matmul %42, %6, %cst {dimension_numbers = #tpu.dot_dimension_numbers<[1], [0], [0], [1], [0, 0, 1, 1], [], []>} : vector<4x4xf32>, vector<4x256xf32>, vector<4x256xf32> -> vector<4x256xf32>
    %cst_29 = arith.constant dense<0.000000e+00> : vector<4x256xf32>
    %60 = tpu.matmul %44, %10, %cst_29 {dimension_numbers = #tpu.dot_dimension_numbers<[1], [0], [0], [1], [0, 0, 1, 1], [], []>} : vector<4x4xf32>, vector<4x256xf32>, vector<4x256xf32> -> vector<4x256xf32>
    %61 = arith.addf %59, %60 : vector<4x256xf32>
    %cst_30 = arith.constant dense<0.000000e+00> : vector<4x256xf32>
    %62 = tpu.matmul %46, %14, %cst_30 {dimension_numbers = #tpu.dot_dimension_numbers<[1], [0], [0], [1], [0, 0, 1, 1], [], []>} : vector<4x4xf32>, vector<4x256xf32>, vector<4x256xf32> -> vector<4x256xf32>
    %63 = arith.addf %61, %62 : vector<4x256xf32>
    %cst_31 = arith.constant dense<0.000000e+00> : vector<4x256xf32>
    %64 = tpu.matmul %48, %18, %cst_31 {dimension_numbers = #tpu.dot_dimension_numbers<[1], [0], [0], [1], [0, 0, 1, 1], [], []>} : vector<4x4xf32>, vector<4x256xf32>, vector<4x256xf32> -> vector<4x256xf32>
    %65 = arith.addf %63, %64 : vector<4x256xf32>
    %cst_32 = arith.constant dense<0.000000e+00> : vector<4x256xf32>
    %66 = tpu.matmul %50, %21, %cst_32 {dimension_numbers = #tpu.dot_dimension_numbers<[1], [0], [0], [1], [0, 0, 1, 1], [], []>} : vector<4x4xf32>, vector<4x256xf32>, vector<4x256xf32> -> vector<4x256xf32>
    %67 = arith.addf %65, %66 : vector<4x256xf32>
    %cst_33 = arith.constant dense<0.000000e+00> : vector<4x256xf32>
    %68 = tpu.matmul %52, %25, %cst_33 {dimension_numbers = #tpu.dot_dimension_numbers<[1], [0], [0], [1], [0, 0, 1, 1], [], []>} : vector<4x4xf32>, vector<4x256xf32>, vector<4x256xf32> -> vector<4x256xf32>
    %69 = arith.addf %67, %68 : vector<4x256xf32>
    %cst_34 = arith.constant dense<0.000000e+00> : vector<4x256xf32>
    %70 = tpu.matmul %54, %29, %cst_34 {dimension_numbers = #tpu.dot_dimension_numbers<[1], [0], [0], [1], [0, 0, 1, 1], [], []>} : vector<4x4xf32>, vector<4x256xf32>, vector<4x256xf32> -> vector<4x256xf32>
    %71 = arith.addf %69, %70 : vector<4x256xf32>
    %cst_35 = arith.constant dense<0.000000e+00> : vector<4x256xf32>
    %72 = tpu.matmul %56, %33, %cst_35 {dimension_numbers = #tpu.dot_dimension_numbers<[1], [0], [0], [1], [0, 0, 1, 1], [], []>} : vector<4x4xf32>, vector<4x256xf32>, vector<4x256xf32> -> vector<4x256xf32>
    %73 = arith.addf %71, %72 : vector<4x256xf32>
    %cst_36 = arith.constant dense<0.000000e+00> : vector<4x256xf32>
    %74 = tpu.matmul %58, %37, %cst_36 {dimension_numbers = #tpu.dot_dimension_numbers<[1], [0], [0], [1], [0, 0, 1, 1], [], []>} : vector<4x4xf32>, vector<4x256xf32>, vector<4x256xf32> -> vector<4x256xf32>
    %75 = arith.addf %73, %74 : vector<4x256xf32>
    %76 = vector.broadcast %38 : vector<4x1xf32> to vector<4x256xf32>
    %77 = arith.addf %75, %76 : vector<4x256xf32>
    %cst_37 = arith.constant 0.000000e+00 : f32
    %78 = vector.broadcast %cst_37 : f32 to vector<4x256xf32>
    %79 = arith.maximumf %77, %78 : vector<4x256xf32>
    %cst_38 = arith.constant dense<0.000000e+00> : vector<8x256xf32>
    %80 = tpu.matmul %39, %79, %cst_38 {dimension_numbers = #tpu.dot_dimension_numbers<[1], [0], [0], [1], [0, 0, 1, 1], [], []>} : vector<8x4xf32>, vector<4x256xf32>, vector<8x256xf32> -> vector<8x256xf32>
    %81 = vector.broadcast %40 : vector<8x1xf32> to vector<8x256xf32>
    %82 = arith.addf %80, %81 : vector<8x256xf32>
    %c0_39 = arith.constant 0 : index
    %c0_40 = arith.constant 0 : index
    %c0_41 = arith.constant 0 : index
    %83 = vector.load %arg7[%c0_39, %c0_40, %c0_41] : memref<1x8x256xf32, #tpu.memory_space<vmem>>, vector<1x8x256xf32>
    %84 = vector.shape_cast %83 : vector<1x8x256xf32> to vector<8x256xf32>
    %85 = vector.shape_cast %82 : vector<8x256xf32> to vector<1x8x256xf32>
    tpu.vector_store %arg7[%c0_39, %c0_40, %c0_41], %85 {strides = array<i32>} : memref<1x8x256xf32, #tpu.memory_space<vmem>>, vector<1x8x256xf32>,
    return
  }
  func.func @transform_0(%arg0: i32) -> (i32, i32, i32) {
    %c0_i32 = arith.constant 0 : i32
    %c0_i32_0 = arith.constant 0 : i32
    %c0_i32_1 = arith.constant 0 : i32
    return %arg0, %c0_i32, %c0_i32_0 : i32, i32, i32
  }
  func.func @transform_1(%arg0: i32) -> (i32, i32) {
    %c0_i32 = arith.constant 0 : i32
    %c0_i32_0 = arith.constant 0 : i32
    %c0_i32_1 = arith.constant 0 : i32
    return %c0_i32, %c0_i32_0 : i32, i32
  }
  func.func @transform_2(%arg0: i32) -> (i32, i32, i32) {
    %c0_i32 = arith.constant 0 : i32
    %c0_i32_0 = arith.constant 0 : i32
    %c0_i32_1 = arith.constant 0 : i32
    %c0_i32_2 = arith.constant 0 : i32
    return %c0_i32, %c0_i32_0, %c0_i32_1 : i32, i32, i32
  }
  func.func @transform_3(%arg0: i32) -> (i32, i32) {
    %c0_i32 = arith.constant 0 : i32
    %c0_i32_0 = arith.constant 0 : i32
    %c0_i32_1 = arith.constant 0 : i32
    return %c0_i32, %c0_i32_0 : i32, i32
  }
  func.func @transform_4(%arg0: i32) -> (i32, i32) {
    %c0_i32 = arith.constant 0 : i32
    %c0_i32_0 = arith.constant 0 : i32
    %c0_i32_1 = arith.constant 0 : i32
    return %c0_i32, %c0_i32_0 : i32, i32
  }
  func.func @transform_5(%arg0: i32) -> (i32, i32) {
    %c0_i32 = arith.constant 0 : i32
    %c0_i32_0 = arith.constant 0 : i32
    %c0_i32_1 = arith.constant 0 : i32
    return %c0_i32, %c0_i32_0 : i32, i32
  }
  func.func @transform_6(%arg0: i32) -> (i32, i32, i32) {
    %c0_i32 = arith.constant 0 : i32
    %c0_i32_0 = arith.constant 0 : i32
    %c0_i32_1 = arith.constant 0 : i32
    return %arg0, %c0_i32, %c0_i32_0 : i32, i32, i32
  }
}

</mosaic_0001>

<llo_original>
// kernel: tpu_custom_call.1
$region0: #{tpu_custom_call.1}
  #allocation0 [shape = 'u32[]', space=smem, size = 0x4, offset = 0x4, fixed_abs, tag = 'smem constant byte address 0x4 - core index']
  #allocation1 [shape = 'u32[144,128]{1,0:T(1,128)}', space=vmem, size = 0x12000, scoped, tag = 'internal scratch']
  %s0 = inlined_call_operand.vmem [shape: f32[2,4,256], index: 0, kind: input, shape index: {}]
  %s1 = inlined_call_operand.vmem [shape: f32[9,256], index: 1, kind: input, shape index: {}]
  %s2 = inlined_call_operand.vmem [shape: f32[9,4,4], index: 2, kind: input, shape index: {}]
  %s3 = inlined_call_operand.vmem [shape: f32[4,1], index: 3, kind: input, shape index: {}]
  %s4 = inlined_call_operand.vmem [shape: f32[8,4], index: 4, kind: input, shape index: {}]
  %s5 = inlined_call_operand.vmem [shape: f32[8,1], index: 5, kind: input, shape index: {}]
  %s6 = inlined_call_operand.hbm [shape: f32[2,8,256], index: 6, kind: output, shape index: {}]
  %s7 = sld [smem:[#allocation0]]
  $region57: #{tpu_custom_call.1} parent=0
    _
  %s9 = ssub.s32 1, %s7
  %s10 = scalar_select 0, %s9, %s7
  $region1: #{tpu_custom_call.1} parent=0
    #allocation2 [shape = 'u8[16384]{0}', space=vmem, size = 0x4000, scoped, tag = 'output window, operand 0']
    #allocation3 [shape = 's32[2]{0}', space=sflag, size = 0x8, scoped, tag = 'scoped memory for tpu_custom_call.1']
    %11 = vsyncpa [#allocation3], 0
    %s12 = scalar_lea.sflag [#allocation3], 1
    %13 = vsyncpa %s12, 0
    loop: start=0, step=1, limit=4
    $region2: #{tpu_custom_call.1} parent=1 // loop_pre_header
      _
    $region3: #{tpu_custom_call.1} parent=1 // loop_header
      %s15 = sphi 0, %s19
      %p16 = scmp.ge.s32.totalorder %s15, 4
      %s25 = sphi 0, %s27
      %s28 = sphi 0, %s25
      %s29 = sphi 0, %s28
      %s45 = sphi 0, %s29
      %s49 = sphi 0, %s49
      %s51 = sphi 0, %s49
      %s52 = sphi 0, %s51
      %s66 = sphi 0, %s52
      %s70 = sphi 0, %s70
      %s72 = sphi 0, %s70
      %s73 = sphi 0, %s72
      %s87 = sphi 0, %s73
      %s91 = sphi 0, %s91
      %s93 = sphi 0, %s91
      %s94 = sphi 0, %s93
      %s108 = sphi 0, %s94
      %s112 = sphi 0, %s112
      %s114 = sphi 0, %s112
      %s115 = sphi 0, %s114
      %s129 = sphi 0, %s115
      %s133 = sphi 0, %s133
      %s135 = sphi 0, %s133
      %s136 = sphi 0, %s135
      %s150 = sphi 0, %s136
      %s156 = sphi 0, %s158
      %s159 = sphi 0, %s156
      %s160 = sphi 0, %s159
      %s176 = sphi 0, %s160
    $region4: #{tpu_custom_call.1} parent=1 // loop_header_branch
      %18 = sbr.rel (%p16) target = $region8
    $region5: #{tpu_custom_call.1} parent=1 // loop_body
      %s20 = ssub.s32 %s15, 1
      %s21 = ssub.s32 %s15, 2
      %s22 = sadd.s32 %s15, 1
      %s23 = ssub.s32 %s15, %s22
      %p24 = scmp.eq.s32.totalorder %s23, 0
      %s26 = sadd.s32 %s25, 1
      %s27 = scalar_select %p24, %s25, %s26
      %p30 = pneg %p24
      %p31 = scmp.eq.s32.totalorder %s15, 1
      %p32 = por %p30, %p31
      %p33 = scmp.ne.s32.totalorder %s25, %s28
      %p34 = scmp.eq.s32.totalorder %s15, 0
      %p35 = por %p33, %p34
      %p36 = scmp.ne.s32.totalorder %s25, %s28
      %p37 = scmp.eq.s32.totalorder %s20, 1
      %p38 = por %p36, %p37
      %p39 = scmp.ne.s32.totalorder %s28, %s29
      %p40 = scmp.eq.s32.totalorder %s20, 0
      %p41 = por %p39, %p40
      %p42 = scmp.ne.s32.totalorder %s28, %s29
      %p43 = scmp.eq.s32.totalorder %s21, 1
      %p44 = por %p42, %p43
      %p46 = scmp.ne.s32.totalorder %s29, %s45
      %p47 = scmp.eq.s32.totalorder %s21, 0
      %p48 = por %p46, %p47
      %s50 = sadd.s32 %s49, 1
      %p53 = scmp.eq.s32.totalorder %s15, 1
      %p54 = scmp.ne.s32.totalorder %s49, %s51
      %p55 = scmp.eq.s32.totalorder %s15, 0
      %p56 = por %p54, %p55
      %p57 = scmp.ne.s32.totalorder %s49, %s51
      %p58 = scmp.eq.s32.totalorder %s20, 1
      %p59 = por %p57, %p58
      %p60 = scmp.ne.s32.totalorder %s51, %s52
      %p61 = scmp.eq.s32.totalorder %s20, 0
      %p62 = por %p60, %p61
      %p63 = scmp.ne.s32.totalorder %s51, %s52
      %p64 = scmp.eq.s32.totalorder %s21, 1
      %p65 = por %p63, %p64
      %p67 = scmp.ne.s32.totalorder %s52, %s66
      %p68 = scmp.eq.s32.totalorder %s21, 0
      %p69 = por %p67, %p68
      %s71 = sadd.s32 %s70, 1
      %p74 = scmp.eq.s32.totalorder %s15, 1
      %p75 = scmp.ne.s32.totalorder %s70, %s72
      %p76 = scmp.eq.s32.totalorder %s15, 0
      %p77 = por %p75, %p76
      %p78 = scmp.ne.s32.totalorder %s70, %s72
      %p79 = scmp.eq.s32.totalorder %s20, 1
      %p80 = por %p78, %p79
      %p81 = scmp.ne.s32.totalorder %s72, %s73
      %p82 = scmp.eq.s32.totalorder %s20, 0
      %p83 = por %p81, %p82
      %p84 = scmp.ne.s32.totalorder %s72, %s73
      %p85 = scmp.eq.s32.totalorder %s21, 1
      %p86 = por %p84, %p85
      %p88 = scmp.ne.s32.totalorder %s73, %s87
      %p89 = scmp.eq.s32.totalorder %s21, 0
      %p90 = por %p88, %p89
      %s92 = sadd.s32 %s91, 1
      %p95 = scmp.eq.s32.totalorder %s15, 1
      %p96 = scmp.ne.s32.totalorder %s91, %s93
      %p97 = scmp.eq.s32.totalorder %s15, 0
      %p98 = por %p96, %p97
      %p99 = scmp.ne.s32.totalorder %s91, %s93
      %p100 = scmp.eq.s32.totalorder %s20, 1
      %p101 = por %p99, %p100
      %p102 = scmp.ne.s32.totalorder %s93, %s94
      %p103 = scmp.eq.s32.totalorder %s20, 0
      %p104 = por %p102, %p103
      %p105 = scmp.ne.s32.totalorder %s93, %s94
      %p106 = scmp.eq.s32.totalorder %s21, 1
      %p107 = por %p105, %p106
      %p109 = scmp.ne.s32.totalorder %s94, %s108
      %p110 = scmp.eq.s32.totalorder %s21, 0
      %p111 = por %p109, %p110
      %s113 = sadd.s32 %s112, 1
      %p116 = scmp.eq.s32.totalorder %s15, 1
      %p117 = scmp.ne.s32.totalorder %s112, %s114
      %p118 = scmp.eq.s32.totalorder %s15, 0
      %p119 = por %p117, %p118
      %p120 = scmp.ne.s32.totalorder %s112, %s114
      %p121 = scmp.eq.s32.totalorder %s20, 1
      %p122 = por %p120, %p121
      %p123 = scmp.ne.s32.totalorder %s114, %s115
      %p124 = scmp.eq.s32.totalorder %s20, 0
      %p125 = por %p123, %p124
      %p126 = scmp.ne.s32.totalorder %s114, %s115
      %p127 = scmp.eq.s32.totalorder %s21, 1
      %p128 = por %p126, %p127
      %p130 = scmp.ne.s32.totalorder %s115, %s129
      %p131 = scmp.eq.s32.totalorder %s21, 0
      %p132 = por %p130, %p131
      %s134 = sadd.s32 %s133, 1
      %p137 = scmp.eq.s32.totalorder %s15, 1
      %p138 = scmp.ne.s32.totalorder %s133, %s135
      %p139 = scmp.eq.s32.totalorder %s15, 0
      %p140 = por %p138, %p139
      %p141 = scmp.ne.s32.totalorder %s133, %s135
      %p142 = scmp.eq.s32.totalorder %s20, 1
      %p143 = por %p141, %p142
      %p144 = scmp.ne.s32.totalorder %s135, %s136
      %p145 = scmp.eq.s32.totalorder %s20, 0
      %p146 = por %p144, %p145
      %p147 = scmp.ne.s32.totalorder %s135, %s136
      %p148 = scmp.eq.s32.totalorder %s21, 1
      %p149 = por %p147, %p148
      %p151 = scmp.ne.s32.totalorder %s136, %s150
      %p152 = scmp.eq.s32.totalorder %s21, 0
      %p153 = por %p151, %p152
      %s154 = ssub.s32 %s15, %s22
      %p155 = scmp.eq.s32.totalorder %s154, 0
      %s157 = sadd.s32 %s156, 1
      %s158 = scalar_select %p155, %s156, %s157
      %p161 = pneg %p155
      %p162 = scmp.eq.s32.totalorder %s15, 1
      %p163 = por %p161, %p162
      %p164 = scmp.ne.s32.totalorder %s156, %s159
      %p165 = scmp.eq.s32.totalorder %s15, 0
      %p166 = por %p164, %p165
      %p167 = scmp.ne.s32.totalorder %s156, %s159
      %p168 = scmp.eq.s32.totalorder %s20, 1
      %p169 = por %p167, %p168
      %p170 = scmp.ne.s32.totalorder %s159, %s160
      %p171 = scmp.eq.s32.totalorder %s20, 0
      %p172 = por %p170, %p171
      %p173 = scmp.ne.s32.totalorder %s159, %s160
      %p174 = scmp.eq.s32.totalorder %s21, 1
      %p175 = por %p173, %p174
      %p177 = scmp.ne.s32.totalorder %s160, %s176
      %p178 = scmp.eq.s32.totalorder %s21, 0
      %p179 = por %p177, %p178
      %p180 = scmp.le.s32.totalorder 1, %s15
      %p181 = scmp.lt.s32.totalorder %s15, 3
      %p182 = pnand %p180, %p181
      %p183 = pneg %p182
      // Predicated region
      $region9: #{tpu_custom_call.1} parent=5 // pred_check
        _
      $region10: #{tpu_custom_call.1} parent=5 // pred_check_branch
        %185 = sbr.rel (%p182) target = $region12
      $region11: #{tpu_custom_call.1} parent=5 // pred_region
        %s186 = ssub.s32 %s15, 1
        // Predicated region
        $region13: #{tpu_custom_call.1} parent=11 // pred_check
          %p187 = pneg %p62
        $region14: #{tpu_custom_call.1} parent=11 // pred_check_branch
          %189 = sbr.rel (%p187) target = $region16
        $region15: #{tpu_custom_call.1} parent=11 // pred_region
          _
        $region16: #{tpu_custom_call.1} parent=11 // pred_fallthru
          _
        // Predicated region
        $region17: #{tpu_custom_call.1} parent=11 // pred_check
          %p190 = pneg %p83
        $region18: #{tpu_custom_call.1} parent=11 // pred_check_branch
          %192 = sbr.rel (%p190) target = $region20
        $region19: #{tpu_custom_call.1} parent=11 // pred_region
          _
        $region20: #{tpu_custom_call.1} parent=11 // pred_fallthru
          _
        // Predicated region
        $region21: #{tpu_custom_call.1} parent=11 // pred_check
          %p193 = pneg %p104
        $region22: #{tpu_custom_call.1} parent=11 // pred_check_branch
          %195 = sbr.rel (%p193) target = $region24
        $region23: #{tpu_custom_call.1} parent=11 // pred_region
          _
        $region24: #{tpu_custom_call.1} parent=11 // pred_fallthru
          _
        // Predicated region
        $region25: #{tpu_custom_call.1} parent=11 // pred_check
          %p196 = pneg %p125
        $region26: #{tpu_custom_call.1} parent=11 // pred_check_branch
          %198 = sbr.rel (%p196) target = $region28
        $region27: #{tpu_custom_call.1} parent=11 // pred_region
          _
        $region28: #{tpu_custom_call.1} parent=11 // pred_fallthru
          _
        // Predicated region
        $region29: #{tpu_custom_call.1} parent=11 // pred_check
          %p199 = pneg %p146
        $region30: #{tpu_custom_call.1} parent=11 // pred_check_branch
          %201 = sbr.rel (%p199) target = $region32
        $region31: #{tpu_custom_call.1} parent=11 // pred_region
          _
        $region32: #{tpu_custom_call.1} parent=11 // pred_fallthru
          _
      $region12: #{tpu_custom_call.1} parent=5 // pred_fallthru
        _
      %p202 = scmp.lt.s32.totalorder %s15, 2
      // Predicated region
      $region33: #{tpu_custom_call.1} parent=5 // pred_check
        %p203 = pneg %p202
      $region34: #{tpu_custom_call.1} parent=5 // pred_check_branch
        %205 = sbr.rel (%p203) target = $region36
      $region35: #{tpu_custom_call.1} parent=5 // pred_region
        // Predicated region
        $region37: #{tpu_custom_call.1} parent=35 // pred_check
          %p206 = pneg %p35
        $region38: #{tpu_custom_call.1} parent=35 // pred_check_branch
          %208 = sbr.rel (%p206) target = $region40
        $region39: #{tpu_custom_call.1} parent=35 // pred_region
          %p209 = scmp.lt.s32.totalorder %s15, 1
          %s210 = scalar_select %p209, %s15, 1
          %s211 = smul.addr %s210, 2
          %s212 = smul.addr %s211, 4
          %s213 = scalar_lea.vmem %s0, %s212
        $region40: #{tpu_custom_call.1} parent=35 // pred_fallthru
          _
      $region36: #{tpu_custom_call.1} parent=5 // pred_fallthru
        _
      %p214 = scmp.le.s32.totalorder 1, %s15
      %p215 = scmp.lt.s32.totalorder %s15, 3
      %p216 = pnand %p214, %p215
      %p217 = pneg %p216
      // Predicated region
      $region41: #{tpu_custom_call.1} parent=5 // pred_check
        _
      $region42: #{tpu_custom_call.1} parent=5 // pred_check_branch
        %219 = sbr.rel (%p216) target = $region44
      $region43: #{tpu_custom_call.1} parent=5 // pred_region
        %s220 = ssub.s32 %s15, 1
        %p221 = scmp.lt.s32.totalorder %s20, 1
        %s222 = scalar_select %p221, %s20, 1
        %s223 = smul.addr %s222, 2
        %s224 = smul.addr %s223, 4
        %s225 = scalar_lea.vmem %s0, %s224
        %p226 = pneg %p41
        %p227 = pneg %p38
        %p228 = pneg %p62
        %p229 = pneg %p59
        %p230 = pneg %p83
        %p231 = pneg %p80
        %p232 = pneg %p104
        %p233 = pneg %p101
        %p234 = pneg %p125
        %p235 = pneg %p122
        %p236 = pneg %p146
        %p237 = pneg %p143
        %p238 = pneg %p172
        %p239 = pneg %p169
        %s240 = sand.u32 %s159, 1
        %s241 = scalar_lea.sflag [#allocation3], %s240
        %s242 = sand.u32 %s159, 1
        %s243 = smul.addr %s242, 16
        %s244 = scalar_lea.vmem [#allocation2], %s243
        %p245 = scmp.lt.s32.totalorder %s20, 1
        %s246 = scalar_select %p245, %s20, 1
        %s247 = smul.addr %s246, 2
        %s248 = smul.addr %s247, 4
        %s249 = scalar_lea.vmem %s0, %s248
        %v250 = vld [vmem:[%s249] sm:$0xff]
        %v251 = vld [vmem:[%s1] sm:$0xff]
        %v252 = vld [vmem:[%s1 + $0x8] sm:$0xff]
        %v253 = vld [vmem:[%s1 + $0x10] sm:$0x1]
        %v254 = vld [vmem:[%s1 + $0x18] sm:$0x1]
        %v256 = vcombine.high %v250, %v250
        %258 = vrot.lane.b32.xlu0 %v250, 17
        %v259 = vpop.permute.xlu0 %258
        %260 = vrot.lane.b32.xlu0 %v256, 17
        %v261 = vpop.permute.xlu0 %260
        %v262 = vlaneseq
        %v263 = vand.u32 %v262, 127
        %vm264 = vcmp.lt.s32.totalorder %v263, 17
        %v265 = vsel %vm264, %v259, %v261
        %v266 = vsel %vm264, %v261, %v259
        %v267 = vlaneseq
        %v268 = vshrl.u32 %v267, 7
        %v269 = vsub.s32 0, %v268
        %v270 = vrot.slane %v251, %v269
        %v271 = vlaneseq
        %v272 = vshrl.u32 %v271, 7
        %v273 = vsub.s32 0, %v272
        %v274 = vrot.slane %v252, %v273
        %v275 = vmul.f32 %v266, %v270
        %v276 = vmul.f32 %v265, %v274
        %277 = vrot.lane.b32.xlu0 %v250, 16
        %v278 = vpop.permute.xlu0 %277
        %279 = vrot.lane.b32.xlu0 %v256, 16
        %v280 = vpop.permute.xlu0 %279
        %vm281 = vcmp.lt.s32.totalorder %v263, 16
        %v282 = vsel %vm281, %v278, %v280
        %v283 = vsel %vm281, %v280, %v278
        %v284 = vlaneseq
        %v285 = vshrl.u32 %v284, 7
        %v286 = vsub.s32 1, %v285
        %v287 = vrot.slane %v251, %v286
        %v288 = vlaneseq
        %v289 = vshrl.u32 %v288, 7
        %v290 = vsub.s32 1, %v289
        %v291 = vrot.slane %v252, %v290
        %v292 = vmul.f32 %v283, %v287
        %v293 = vmul.f32 %v282, %v291
        %294 = vrot.lane.b32.xlu0 %v250, 15
        %v295 = vpop.permute.xlu0 %294
        %296 = vrot.lane.b32.xlu0 %v256, 15
        %v297 = vpop.permute.xlu0 %296
        %vm298 = vcmp.lt.s32.totalorder %v263, 15
        %v299 = vsel %vm298, %v295, %v297
        %v300 = vsel %vm298, %v297, %v295
        %v301 = vlaneseq
        %v302 = vshrl.u32 %v301, 7
        %v303 = vsub.s32 2, %v302
        %v304 = vrot.slane %v251, %v303
        %v305 = vlaneseq
        %v306 = vshrl.u32 %v305, 7
        %v307 = vsub.s32 2, %v306
        %v308 = vrot.slane %v252, %v307
        %v309 = vmul.f32 %v300, %v304
        %v310 = vmul.f32 %v299, %v308
        %311 = vrot.lane.b32.xlu0 %v250, 1
        %v312 = vpop.permute.xlu0 %311
        %313 = vrot.lane.b32.xlu0 %v256, 1
        %v314 = vpop.permute.xlu0 %313
        %vm315 = vcmp.lt.s32.totalorder %v263, 1
        %v316 = vsel %vm315, %v312, %v314
        %v317 = vsel %vm315, %v314, %v312
        %v318 = vlaneseq
        %v319 = vshrl.u32 %v318, 7
        %v320 = vsub.s32 3, %v319
        %v321 = vrot.slane %v251, %v320
        %v322 = vlaneseq
        %v323 = vshrl.u32 %v322, 7
        %v324 = vsub.s32 3, %v323
        %v325 = vrot.slane %v252, %v324
        %v326 = vmul.f32 %v317, %v321
        %v327 = vmul.f32 %v316, %v325
        %v328 = vlaneseq
        %v329 = vshrl.u32 %v328, 7
        %v330 = vsub.s32 4, %v329
        %v331 = vrot.slane %v251, %v330
        %v332 = vlaneseq
        %v333 = vshrl.u32 %v332, 7
        %v334 = vsub.s32 4, %v333
        %v335 = vrot.slane %v252, %v334
        %v338 = vcombine.low %v331, %v335
        %v340 = vmul.f32 %v250, %v338
        %341 = vrot.lane.b32.xlu0 %v250, 127
        %v342 = vpop.permute.xlu0 %341
        %343 = vrot.lane.b32.xlu0 %v256, 127
        %v344 = vpop.permute.xlu0 %343
        %vm345 = vcmp.lt.s32.totalorder %v263, 127
        %v346 = vsel %vm345, %v342, %v344
        %v347 = vsel %vm345, %v344, %v342
        %v348 = vlaneseq
        %v349 = vshrl.u32 %v348, 7
        %v350 = vsub.s32 5, %v349
        %v351 = vrot.slane %v251, %v350
        %v352 = vlaneseq
        %v353 = vshrl.u32 %v352, 7
        %v354 = vsub.s32 5, %v353
        %v355 = vrot.slane %v252, %v354
        %v356 = vmul.f32 %v346, %v351
        %v357 = vmul.f32 %v347, %v355
        %358 = vrot.lane.b32.xlu0 %v250, 113
        %v359 = vpop.permute.xlu0 %358
        %360 = vrot.lane.b32.xlu0 %v256, 113
        %v361 = vpop.permute.xlu0 %360
        %vm362 = vcmp.lt.s32.totalorder %v263, 113
        %v363 = vsel %vm362, %v359, %v361
        %v364 = vsel %vm362, %v361, %v359
        %v365 = vlaneseq
        %v366 = vshrl.u32 %v365, 7
        %v367 = vsub.s32 6, %v366
        %v368 = vrot.slane %v251, %v367
        %v369 = vlaneseq
        %v370 = vshrl.u32 %v369, 7
        %v371 = vsub.s32 6, %v370
        %v372 = vrot.slane %v252, %v371
        %v373 = vmul.f32 %v363, %v368
        %v374 = vmul.f32 %v364, %v372
        %375 = vrot.lane.b32.xlu0 %v250, 112
        %v376 = vpop.permute.xlu0 %375
        %377 = vrot.lane.b32.xlu0 %v256, 112
        %v378 = vpop.permute.xlu0 %377
        %vm379 = vcmp.lt.s32.totalorder %v263, 112
        %v380 = vsel %vm379, %v376, %v378
        %v381 = vsel %vm379, %v378, %v376
        %v382 = vlaneseq
        %v383 = vshrl.u32 %v382, 7
        %v384 = vsub.s32 7, %v383
        %v385 = vrot.slane %v251, %v384
        %v386 = vlaneseq
        %v387 = vshrl.u32 %v386, 7
        %v388 = vsub.s32 7, %v387
        %v389 = vrot.slane %v252, %v388
        %v390 = vmul.f32 %v380, %v385
        %v391 = vmul.f32 %v381, %v389
        %392 = vrot.lane.b32.xlu0 %v250, 111
        %v393 = vpop.permute.xlu0 %392
        %394 = vrot.lane.b32.xlu0 %v256, 111
        %v395 = vpop.permute.xlu0 %394
        %vm396 = vcmp.lt.s32.totalorder %v263, 111
        %v397 = vsel %vm396, %v393, %v395
        %v398 = vsel %vm396, %v395, %v393
        %v399 = vlaneseq
        %v400 = vshrl.u32 %v399, 7
        %v401 = vsub.s32 0, %v400
        %v402 = vrot.slane %v253, %v401
        %v403 = vlaneseq
        %v404 = vshrl.u32 %v403, 7
        %v405 = vsub.s32 0, %v404
        %v406 = vrot.slane %v254, %v405
        %v407 = vmul.f32 %v397, %v402
        %v408 = vmul.f32 %v398, %v406
        %v409 = vld [vmem:[%s3] sm:$0xf]
        %v410 = vld [vmem:[%s4] sm:$0xff]
        %v411 = vld [vmem:[%s5] sm:$0xff]
        %v412 = vld [vmem:[%s2] sm:$0xf]
        %s413 = scalar_lea.vmem %s2, 4
        %v414 = vld [vmem:[%s413] sm:$0xf]
        %s415 = scalar_lea.vmem %s2, 8
        %v416 = vld [vmem:[%s415] sm:$0xf]
        %s417 = scalar_lea.vmem %s2, 12
        %v418 = vld [vmem:[%s417] sm:$0xf]
        %s419 = scalar_lea.vmem %s2, 16
        %v420 = vld [vmem:[%s419] sm:$0xf]
        %s421 = scalar_lea.vmem %s2, 20
        %v422 = vld [vmem:[%s421] sm:$0xf]
        %s423 = scalar_lea.vmem %s2, 24
        %v424 = vld [vmem:[%s423] sm:$0xf]
        %s425 = scalar_lea.vmem %s2, 28
        %v426 = vld [vmem:[%s425] sm:$0xf]
        %s427 = scalar_lea.vmem %s2, 32
        %v428 = vld [vmem:[%s427] sm:$0xf]
        %vm429 = vcmask 31744
        %v431 = vsel %vm429, %v414, 0
        %vm433 = vcmask 1043456
        %v435 = vsel %vm433, %v292, 0
        %v438 = vsel %vm433, %v293, 0
        %440 = vmatprep.subr.mxu0 0.0
        %441 = vmatpush1.msra.mxu0 0.0
        %442 = vmatprep.subr.mxu0 0.0
        %443 = vmatpush1.msra.mxu0 0.0
        %444 = vmatprep.subr.mxu0 0.0
        %445 = vmatpush1.msra.mxu0 0.0
        %446 = vmatprep.subr.mxu0 0.0
        %447 = vmatpush1.msra.mxu0 0.0
        %448 = vmatprep.subr.mxu0 0.0
        %449 = vmatpush1.msra.mxu0 0.0
        %450 = vmatprep.subr.mxu0 0.0
        %451 = vmatpush1.msra.mxu0 0.0
        %452 = vmatprep.subr.mxu0 0.0
        %453 = vmatpush1.msra.mxu0 0.0
        %454 = vmatprep.subr.mxu0 0.0
        %455 = vmatpush1.msra.mxu0 0.0
        %456 = vmatprep.subr.mxu0 0.0
        %457 = vmatpush1.msra.mxu0 0.0
        %458 = vmatprep.subr.mxu0 0.0
        %459 = vmatpush1.msra.mxu0 0.0
        %460 = vmatprep.subr.mxu0 0.0
        %461 = vmatpush1.msra.mxu0 0.0
        %462 = vmatprep.subr.mxu0 0.0
        %463 = vmatpush1.msra.mxu0 0.0
        %464 = vmatprep.subr.mxu0 0.0
        %465 = vmatpush1.msra.mxu0 0.0
        %466 = vmatprep.subr.mxu0 0.0
        %467 = vmatpush1.msra.mxu0 0.0
        %468 = vmatprep.subr.mxu0 0.0
        %469 = vmatpush1.msra.mxu0 0.0
        %470 = vmatprep.subr.mxu0 %v438
        %471 = vmatpush1.msra.mxu0 %v435
        %472 = vmatprep.subr.mxu0 0.0
        %473 = vmatpush2.msra.mxu0 0.0
        %474 = vmatprep.subr.mxu0 0.0
        %475 = vmatpush2.msra.mxu0 0.0
        %476 = vmatprep.subr.mxu0 0.0
        %477 = vmatpush2.msra.mxu0 0.0
        %478 = vmatprep.subr.mxu0 0.0
        %479 = vmatpush2.msra.mxu0 0.0
        %480 = vmatprep.subr.mxu0 0.0
        %481 = vmatpush2.msra.mxu0 0.0
        %482 = vmatprep.subr.mxu0 0.0
        %483 = vmatpush2.msra.mxu0 0.0
        %484 = vmatprep.subr.mxu0 0.0
        %485 = vmatpush2.msra.mxu0 0.0
        %486 = vmatprep.subr.mxu0 0.0
        %487 = vmatpush2.msra.mxu0 0.0
        %488 = vmatprep.subr.mxu0 0.0
        %489 = vmatpush2.msra.mxu0 0.0
        %490 = vmatprep.subr.mxu0 0.0
        %491 = vmatpush2.msra.mxu0 0.0
        %492 = vmatprep.subr.mxu0 0.0
        %493 = vmatpush2.msra.mxu0 0.0
        %494 = vmatprep.subr.mxu0 0.0
        %495 = vmatpush2.msra.mxu0 0.0
        %496 = vmatprep.subr.mxu0 0.0
        %497 = vmatpush2.msra.mxu0 0.0
        %498 = vmatprep.subr.mxu0 0.0
        %499 = vmatpush2.msra.mxu0 0.0
        %500 = vmatprep.subr.mxu0 0.0
        %501 = vmatpush2.msra.mxu0 0.0
        %502 = vmatprep.subr.mxu0 0.0
        %503 = vmatpush2.msra.mxu0 0.0
        %504 = vmatprep.mubr.f32.mxu0 0.0
        %505 = vmatmul.mubr.f32.gmra.mxu0 %v431
        %v506 = vpop.f32.mrf.mxu0
        %v507 = vadd.f32 0.0, %v506
        %v508 = vpop.f32.mrf.mxu0
        %v509 = vadd.f32 0.0, %v508
        %510 = vdwg.mxu0
        %v512 = vsel %vm429, %v412, 0
        %v515 = vsel %vm433, %v275, 0
        %v518 = vsel %vm433, %v276, 0
        %520 = vmatprep.subr.mxu0 0.0
        %521 = vmatpush1.msra.mxu0 0.0
        %522 = vmatprep.subr.mxu0 0.0
        %523 = vmatpush1.msra.mxu0 0.0
        %524 = vmatprep.subr.mxu0 0.0
        %525 = vmatpush1.msra.mxu0 0.0
        %526 = vmatprep.subr.mxu0 0.0
        %527 = vmatpush1.msra.mxu0 0.0
        %528 = vmatprep.subr.mxu0 0.0
        %529 = vmatpush1.msra.mxu0 0.0
        %530 = vmatprep.subr.mxu0 0.0
        %531 = vmatpush1.msra.mxu0 0.0
        %532 = vmatprep.subr.mxu0 0.0
        %533 = vmatpush1.msra.mxu0 0.0
        %534 = vmatprep.subr.mxu0 0.0
        %535 = vmatpush1.msra.mxu0 0.0
        %536 = vmatprep.subr.mxu0 0.0
        %537 = vmatpush1.msra.mxu0 0.0
        %538 = vmatprep.subr.mxu0 0.0
        %539 = vmatpush1.msra.mxu0 0.0
        %540 = vmatprep.subr.mxu0 0.0
        %541 = vmatpush1.msra.mxu0 0.0
        %542 = vmatprep.subr.mxu0 0.0
        %543 = vmatpush1.msra.mxu0 0.0
        %544 = vmatprep.subr.mxu0 0.0
        %545 = vmatpush1.msra.mxu0 0.0
        %546 = vmatprep.subr.mxu0 0.0
        %547 = vmatpush1.msra.mxu0 0.0
        %548 = vmatprep.subr.mxu0 0.0
        %549 = vmatpush1.msra.mxu0 0.0
        %550 = vmatprep.subr.mxu0 %v518
        %551 = vmatpush1.msra.mxu0 %v515
        %552 = vmatprep.subr.mxu0 0.0
        %553 = vmatpush2.msra.mxu0 0.0
        %554 = vmatprep.subr.mxu0 0.0
        %555 = vmatpush2.msra.mxu0 0.0
        %556 = vmatprep.subr.mxu0 0.0
        %557 = vmatpush2.msra.mxu0 0.0
        %558 = vmatprep.subr.mxu0 0.0
        %559 = vmatpush2.msra.mxu0 0.0
        %560 = vmatprep.subr.mxu0 0.0
        %561 = vmatpush2.msra.mxu0 0.0
        %562 = vmatprep.subr.mxu0 0.0
        %563 = vmatpush2.msra.mxu0 0.0
        %564 = vmatprep.subr.mxu0 0.0
        %565 = vmatpush2.msra.mxu0 0.0
        %566 = vmatprep.subr.mxu0 0.0
        %567 = vmatpush2.msra.mxu0 0.0
        %568 = vmatprep.subr.mxu0 0.0
        %569 = vmatpush2.msra.mxu0 0.0
        %570 = vmatprep.subr.mxu0 0.0
        %571 = vmatpush2.msra.mxu0 0.0
        %572 = vmatprep.subr.mxu0 0.0
        %573 = vmatpush2.msra.mxu0 0.0
        %574 = vmatprep.subr.mxu0 0.0
        %575 = vmatpush2.msra.mxu0 0.0
        %576 = vmatprep.subr.mxu0 0.0
        %577 = vmatpush2.msra.mxu0 0.0
        %578 = vmatprep.subr.mxu0 0.0
        %579 = vmatpush2.msra.mxu0 0.0
        %580 = vmatprep.subr.mxu0 0.0
        %581 = vmatpush2.msra.mxu0 0.0
        %582 = vmatprep.subr.mxu0 0.0
        %583 = vmatpush2.msra.mxu0 0.0
        %584 = vmatprep.mubr.f32.mxu0 0.0
        %585 = vmatmul.mubr.f32.gmra.mxu0 %v512
        %v586 = vpop.f32.mrf.mxu0
        %v587 = vadd.f32 %v507, %v586
        %v588 = vpop.f32.mrf.mxu0
        %v589 = vadd.f32 %v509, %v588
        %590 = vdwg.mxu0
        %v592 = vsel %vm429, %v416, 0
        %v595 = vsel %vm433, %v309, 0
        %v598 = vsel %vm433, %v310, 0
        %600 = vmatprep.subr.mxu0 0.0
        %601 = vmatpush1.msra.mxu0 0.0
        %602 = vmatprep.subr.mxu0 0.0
        %603 = vmatpush1.msra.mxu0 0.0
        %604 = vmatprep.subr.mxu0 0.0
        %605 = vmatpush1.msra.mxu0 0.0
        %606 = vmatprep.subr.mxu0 0.0
        %607 = vmatpush1.msra.mxu0 0.0
        %608 = vmatprep.subr.mxu0 0.0
        %609 = vmatpush1.msra.mxu0 0.0
        %610 = vmatprep.subr.mxu0 0.0
        %611 = vmatpush1.msra.mxu0 0.0
        %612 = vmatprep.subr.mxu0 0.0
        %613 = vmatpush1.msra.mxu0 0.0
        %614 = vmatprep.subr.mxu0 0.0
        %615 = vmatpush1.msra.mxu0 0.0
        %616 = vmatprep.subr.mxu0 0.0
        %617 = vmatpush1.msra.mxu0 0.0
        %618 = vmatprep.subr.mxu0 0.0
        %619 = vmatpush1.msra.mxu0 0.0
        %620 = vmatprep.subr.mxu0 0.0
        %621 = vmatpush1.msra.mxu0 0.0
        %622 = vmatprep.subr.mxu0 0.0
        %623 = vmatpush1.msra.mxu0 0.0
        %624 = vmatprep.subr.mxu0 0.0
        %625 = vmatpush1.msra.mxu0 0.0
        %626 = vmatprep.subr.mxu0 0.0
        %627 = vmatpush1.msra.mxu0 0.0
        %628 = vmatprep.subr.mxu0 0.0
        %629 = vmatpush1.msra.mxu0 0.0
        %630 = vmatprep.subr.mxu0 %v598
        %631 = vmatpush1.msra.mxu0 %v595
        %632 = vmatprep.subr.mxu0 0.0
        %633 = vmatpush2.msra.mxu0 0.0
        %634 = vmatprep.subr.mxu0 0.0
        %635 = vmatpush2.msra.mxu0 0.0
        %636 = vmatprep.subr.mxu0 0.0
        %637 = vmatpush2.msra.mxu0 0.0
        %638 = vmatprep.subr.mxu0 0.0
        %639 = vmatpush2.msra.mxu0 0.0
        %640 = vmatprep.subr.mxu0 0.0
        %641 = vmatpush2.msra.mxu0 0.0
        %642 = vmatprep.subr.mxu0 0.0
        %643 = vmatpush2.msra.mxu0 0.0
        %644 = vmatprep.subr.mxu0 0.0
        %645 = vmatpush2.msra.mxu0 0.0
        %646 = vmatprep.subr.mxu0 0.0
        %647 = vmatpush2.msra.mxu0 0.0
        %648 = vmatprep.subr.mxu0 0.0
        %649 = vmatpush2.msra.mxu0 0.0
        %650 = vmatprep.subr.mxu0 0.0
        %651 = vmatpush2.msra.mxu0 0.0
        %652 = vmatprep.subr.mxu0 0.0
        %653 = vmatpush2.msra.mxu0 0.0
        %654 = vmatprep.subr.mxu0 0.0
        %655 = vmatpush2.msra.mxu0 0.0
        %656 = vmatprep.subr.mxu0 0.0
        %657 = vmatpush2.msra.mxu0 0.0
        %658 = vmatprep.subr.mxu0 0.0
        %659 = vmatpush2.msra.mxu0 0.0
        %660 = vmatprep.subr.mxu0 0.0
        %661 = vmatpush2.msra.mxu0 0.0
        %662 = vmatprep.subr.mxu0 0.0
        %663 = vmatpush2.msra.mxu0 0.0
        %664 = vmatprep.mubr.f32.mxu0 0.0
        %665 = vmatmul.mubr.f32.gmra.mxu0 %v592
        %v666 = vpop.f32.mrf.mxu0
        %v667 = vadd.f32 0.0, %v666
        %v668 = vpop.f32.mrf.mxu0
        %v669 = vadd.f32 0.0, %v668
        %670 = vdwg.mxu0
        %v671 = vadd.f32 %v587, %v667
        %v672 = vadd.f32 %v589, %v669
        %v674 = vsel %vm429, %v418, 0
        %v677 = vsel %vm433, %v326, 0
        %v680 = vsel %vm433, %v327, 0
        %682 = vmatprep.subr.mxu0 0.0
        %683 = vmatpush1.msra.mxu0 0.0
        %684 = vmatprep.subr.mxu0 0.0
        %685 = vmatpush1.msra.mxu0 0.0
        %686 = vmatprep.subr.mxu0 0.0
        %687 = vmatpush1.msra.mxu0 0.0
        %688 = vmatprep.subr.mxu0 0.0
        %689 = vmatpush1.msra.mxu0 0.0
        %690 = vmatprep.subr.mxu0 0.0
        %691 = vmatpush1.msra.mxu0 0.0
        %692 = vmatprep.subr.mxu0 0.0
        %693 = vmatpush1.msra.mxu0 0.0
        %694 = vmatprep.subr.mxu0 0.0
        %695 = vmatpush1.msra.mxu0 0.0
        %696 = vmatprep.subr.mxu0 0.0
        %697 = vmatpush1.msra.mxu0 0.0
        %698 = vmatprep.subr.mxu0 0.0
        %699 = vmatpush1.msra.mxu0 0.0
        %700 = vmatprep.subr.mxu0 0.0
        %701 = vmatpush1.msra.mxu0 0.0
        %702 = vmatprep.subr.mxu0 0.0
        %703 = vmatpush1.msra.mxu0 0.0
        %704 = vmatprep.subr.mxu0 0.0
        %705 = vmatpush1.msra.mxu0 0.0
        %706 = vmatprep.subr.mxu0 0.0
        %707 = vmatpush1.msra.mxu0 0.0
        %708 = vmatprep.subr.mxu0 0.0
        %709 = vmatpush1.msra.mxu0 0.0
        %710 = vmatprep.subr.mxu0 0.0
        %711 = vmatpush1.msra.mxu0 0.0
        %712 = vmatprep.subr.mxu0 %v680
        %713 = vmatpush1.msra.mxu0 %v677
        %714 = vmatprep.subr.mxu0 0.0
        %715 = vmatpush2.msra.mxu0 0.0
        %716 = vmatprep.subr.mxu0 0.0
        %717 = vmatpush2.msra.mxu0 0.0
        %718 = vmatprep.subr.mxu0 0.0
        %719 = vmatpush2.msra.mxu0 0.0
        %720 = vmatprep.subr.mxu0 0.0
        %721 = vmatpush2.msra.mxu0 0.0
        %722 = vmatprep.subr.mxu0 0.0
        %723 = vmatpush2.msra.mxu0 0.0
        %724 = vmatprep.subr.mxu0 0.0
        %725 = vmatpush2.msra.mxu0 0.0
        %726 = vmatprep.subr.mxu0 0.0
        %727 = vmatpush2.msra.mxu0 0.0
        %728 = vmatprep.subr.mxu0 0.0
        %729 = vmatpush2.msra.mxu0 0.0
        %730 = vmatprep.subr.mxu0 0.0
        %731 = vmatpush2.msra.mxu0 0.0
        %732 = vmatprep.subr.mxu0 0.0
        %733 = vmatpush2.msra.mxu0 0.0
        %734 = vmatprep.subr.mxu0 0.0
        %735 = vmatpush2.msra.mxu0 0.0
        %736 = vmatprep.subr.mxu0 0.0
        %737 = vmatpush2.msra.mxu0 0.0
        %738 = vmatprep.subr.mxu0 0.0
        %739 = vmatpush2.msra.mxu0 0.0
        %740 = vmatprep.subr.mxu0 0.0
        %741 = vmatpush2.msra.mxu0 0.0
        %742 = vmatprep.subr.mxu0 0.0
        %743 = vmatpush2.msra.mxu0 0.0
        %744 = vmatprep.subr.mxu0 0.0
        %745 = vmatpush2.msra.mxu0 0.0
        %746 = vmatprep.mubr.f32.mxu0 0.0
        %747 = vmatmul.mubr.f32.gmra.mxu0 %v674
        %v748 = vpop.f32.mrf.mxu0
        %v749 = vadd.f32 0.0, %v748
        %v750 = vpop.f32.mrf.mxu0
        %v751 = vadd.f32 0.0, %v750
        %752 = vdwg.mxu0
        %v753 = vadd.f32 %v671, %v749
        %v754 = vadd.f32 %v672, %v751
        %v756 = vcombine.high %v340, %v340
        %v758 = vsel %vm429, %v420, 0
        %v760 = vsel %vm433, %v340, 0
        %v762 = vsel %vm433, %v756, 0
        %764 = vmatprep.subr.mxu0 0.0
        %765 = vmatpush1.msra.mxu0 0.0
        %766 = vmatprep.subr.mxu0 0.0
        %767 = vmatpush1.msra.mxu0 0.0
        %768 = vmatprep.subr.mxu0 0.0
        %769 = vmatpush1.msra.mxu0 0.0
        %770 = vmatprep.subr.mxu0 0.0
        %771 = vmatpush1.msra.mxu0 0.0
        %772 = vmatprep.subr.mxu0 0.0
        %773 = vmatpush1.msra.mxu0 0.0
        %774 = vmatprep.subr.mxu0 0.0
        %775 = vmatpush1.msra.mxu0 0.0
        %776 = vmatprep.subr.mxu0 0.0
        %777 = vmatpush1.msra.mxu0 0.0
        %778 = vmatprep.subr.mxu0 0.0
        %779 = vmatpush1.msra.mxu0 0.0
        %780 = vmatprep.subr.mxu0 0.0
        %781 = vmatpush1.msra.mxu0 0.0
        %782 = vmatprep.subr.mxu0 0.0
        %783 = vmatpush1.msra.mxu0 0.0
        %784 = vmatprep.subr.mxu0 0.0
        %785 = vmatpush1.msra.mxu0 0.0
        %786 = vmatprep.subr.mxu0 0.0
        %787 = vmatpush1.msra.mxu0 0.0
        %788 = vmatprep.subr.mxu0 0.0
        %789 = vmatpush1.msra.mxu0 0.0
        %790 = vmatprep.subr.mxu0 0.0
        %791 = vmatpush1.msra.mxu0 0.0
        %792 = vmatprep.subr.mxu0 0.0
        %793 = vmatpush1.msra.mxu0 0.0
        %794 = vmatprep.subr.mxu0 %v762
        %795 = vmatpush1.msra.mxu0 %v760
        %796 = vmatprep.subr.mxu0 0.0
        %797 = vmatpush2.msra.mxu0 0.0
        %798 = vmatprep.subr.mxu0 0.0
        %799 = vmatpush2.msra.mxu0 0.0
        %800 = vmatprep.subr.mxu0 0.0
        %801 = vmatpush2.msra.mxu0 0.0
        %802 = vmatprep.subr.mxu0 0.0
        %803 = vmatpush2.msra.mxu0 0.0
        %804 = vmatprep.subr.mxu0 0.0
        %805 = vmatpush2.msra.mxu0 0.0
        %806 = vmatprep.subr.mxu0 0.0
        %807 = vmatpush2.msra.mxu0 0.0
        %808 = vmatprep.subr.mxu0 0.0
        %809 = vmatpush2.msra.mxu0 0.0
        %810 = vmatprep.subr.mxu0 0.0
        %811 = vmatpush2.msra.mxu0 0.0
        %812 = vmatprep.subr.mxu0 0.0
        %813 = vmatpush2.msra.mxu0 0.0
        %814 = vmatprep.subr.mxu0 0.0
        %815 = vmatpush2.msra.mxu0 0.0
        %816 = vmatprep.subr.mxu0 0.0
        %817 = vmatpush2.msra.mxu0 0.0
        %818 = vmatprep.subr.mxu0 0.0
        %819 = vmatpush2.msra.mxu0 0.0
        %820 = vmatprep.subr.mxu0 0.0
        %821 = vmatpush2.msra.mxu0 0.0
        %822 = vmatprep.subr.mxu0 0.0
        %823 = vmatpush2.msra.mxu0 0.0
        %824 = vmatprep.subr.mxu0 0.0
        %825 = vmatpush2.msra.mxu0 0.0
        %826 = vmatprep.subr.mxu0 0.0
        %827 = vmatpush2.msra.mxu0 0.0
        %828 = vmatprep.mubr.f32.mxu0 0.0
        %829 = vmatmul.mubr.f32.gmra.mxu0 %v758
        %v830 = vpop.f32.mrf.mxu0
        %v831 = vadd.f32 0.0, %v830
        %v832 = vpop.f32.mrf.mxu0
        %v833 = vadd.f32 0.0, %v832
        %834 = vdwg.mxu0
        %v835 = vadd.f32 %v753, %v831
        %v836 = vadd.f32 %v754, %v833
        %v838 = vsel %vm429, %v422, 0
        %v841 = vsel %vm433, %v356, 0
        %v844 = vsel %vm433, %v357, 0
        %846 = vmatprep.subr.mxu0 0.0
        %847 = vmatpush1.msra.mxu0 0.0
        %848 = vmatprep.subr.mxu0 0.0
        %849 = vmatpush1.msra.mxu0 0.0
        %850 = vmatprep.subr.mxu0 0.0
        %851 = vmatpush1.msra.mxu0 0.0
        %852 = vmatprep.subr.mxu0 0.0
        %853 = vmatpush1.msra.mxu0 0.0
        %854 = vmatprep.subr.mxu0 0.0
        %855 = vmatpush1.msra.mxu0 0.0
        %856 = vmatprep.subr.mxu0 0.0
        %857 = vmatpush1.msra.mxu0 0.0
        %858 = vmatprep.subr.mxu0 0.0
        %859 = vmatpush1.msra.mxu0 0.0
        %860 = vmatprep.subr.mxu0 0.0
        %861 = vmatpush1.msra.mxu0 0.0
        %862 = vmatprep.subr.mxu0 0.0
        %863 = vmatpush1.msra.mxu0 0.0
        %864 = vmatprep.subr.mxu0 0.0
        %865 = vmatpush1.msra.mxu0 0.0
        %866 = vmatprep.subr.mxu0 0.0
        %867 = vmatpush1.msra.mxu0 0.0
        %868 = vmatprep.subr.mxu0 0.0
        %869 = vmatpush1.msra.mxu0 0.0
        %870 = vmatprep.subr.mxu0 0.0
        %871 = vmatpush1.msra.mxu0 0.0
        %872 = vmatprep.subr.mxu0 0.0
        %873 = vmatpush1.msra.mxu0 0.0
        %874 = vmatprep.subr.mxu0 0.0
        %875 = vmatpush1.msra.mxu0 0.0
        %876 = vmatprep.subr.mxu0 %v844
        %877 = vmatpush1.msra.mxu0 %v841
        %878 = vmatprep.subr.mxu0 0.0
        %879 = vmatpush2.msra.mxu0 0.0
        %880 = vmatprep.subr.mxu0 0.0
        %881 = vmatpush2.msra.mxu0 0.0
        %882 = vmatprep.subr.mxu0 0.0
        %883 = vmatpush2.msra.mxu0 0.0
        %884 = vmatprep.subr.mxu0 0.0
        %885 = vmatpush2.msra.mxu0 0.0
        %886 = vmatprep.subr.mxu0 0.0
        %887 = vmatpush2.msra.mxu0 0.0
        %888 = vmatprep.subr.mxu0 0.0
        %889 = vmatpush2.msra.mxu0 0.0
        %890 = vmatprep.subr.mxu0 0.0
        %891 = vmatpush2.msra.mxu0 0.0
        %892 = vmatprep.subr.mxu0 0.0
        %893 = vmatpush2.msra.mxu0 0.0
        %894 = vmatprep.subr.mxu0 0.0
        %895 = vmatpush2.msra.mxu0 0.0
        %896 = vmatprep.subr.mxu0 0.0
        %897 = vmatpush2.msra.mxu0 0.0
        %898 = vmatprep.subr.mxu0 0.0
        %899 = vmatpush2.msra.mxu0 0.0
        %900 = vmatprep.subr.mxu0 0.0
        %901 = vmatpush2.msra.mxu0 0.0
        %902 = vmatprep.subr.mxu0 0.0
        %903 = vmatpush2.msra.mxu0 0.0
        %904 = vmatprep.subr.mxu0 0.0
        %905 = vmatpush2.msra.mxu0 0.0
        %906 = vmatprep.subr.mxu0 0.0
        %907 = vmatpush2.msra.mxu0 0.0
        %908 = vmatprep.subr.mxu0 0.0
        %909 = vmatpush2.msra.mxu0 0.0
        %910 = vmatprep.mubr.f32.mxu0 0.0
        %911 = vmatmul.mubr.f32.gmra.mxu0 %v838
        %v912 = vpop.f32.mrf.mxu0
        %v913 = vadd.f32 0.0, %v912
        %v914 = vpop.f32.mrf.mxu0
        %v915 = vadd.f32 0.0, %v914
        %916 = vdwg.mxu0
        %v917 = vadd.f32 %v835, %v913
        %v918 = vadd.f32 %v836, %v915
        %v920 = vsel %vm429, %v424, 0
        %v923 = vsel %vm433, %v373, 0
        %v926 = vsel %vm433, %v374, 0
        %928 = vmatprep.subr.mxu0 0.0
        %929 = vmatpush1.msra.mxu0 0.0
        %930 = vmatprep.subr.mxu0 0.0
        %931 = vmatpush1.msra.mxu0 0.0
        %932 = vmatprep.subr.mxu0 0.0
        %933 = vmatpush1.msra.mxu0 0.0
        %934 = vmatprep.subr.mxu0 0.0
        %935 = vmatpush1.msra.mxu0 0.0
        %936 = vmatprep.subr.mxu0 0.0
        %937 = vmatpush1.msra.mxu0 0.0
        %938 = vmatprep.subr.mxu0 0.0
        %939 = vmatpush1.msra.mxu0 0.0
        %940 = vmatprep.subr.mxu0 0.0
        %941 = vmatpush1.msra.mxu0 0.0
        %942 = vmatprep.subr.mxu0 0.0
        %943 = vmatpush1.msra.mxu0 0.0
        %944 = vmatprep.subr.mxu0 0.0
        %945 = vmatpush1.msra.mxu0 0.0
        %946 = vmatprep.subr.mxu0 0.0
        %947 = vmatpush1.msra.mxu0 0.0
        %948 = vmatprep.subr.mxu0 0.0
        %949 = vmatpush1.msra.mxu0 0.0
        %950 = vmatprep.subr.mxu0 0.0
        %951 = vmatpush1.msra.mxu0 0.0
        %952 = vmatprep.subr.mxu0 0.0
        %953 = vmatpush1.msra.mxu0 0.0
        %954 = vmatprep.subr.mxu0 0.0
        %955 = vmatpush1.msra.mxu0 0.0
        %956 = vmatprep.subr.mxu0 0.0
        %957 = vmatpush1.msra.mxu0 0.0
        %958 = vmatprep.subr.mxu0 %v926
        %959 = vmatpush1.msra.mxu0 %v923
        %960 = vmatprep.subr.mxu0 0.0
        %961 = vmatpush2.msra.mxu0 0.0
        %962 = vmatprep.subr.mxu0 0.0
        %963 = vmatpush2.msra.mxu0 0.0
        %964 = vmatprep.subr.mxu0 0.0
        %965 = vmatpush2.msra.mxu0 0.0
        %966 = vmatprep.subr.mxu0 0.0
        %967 = vmatpush2.msra.mxu0 0.0
        %968 = vmatprep.subr.mxu0 0.0
        %969 = vmatpush2.msra.mxu0 0.0
        %970 = vmatprep.subr.mxu0 0.0
        %971 = vmatpush2.msra.mxu0 0.0
        %972 = vmatprep.subr.mxu0 0.0
        %973 = vmatpush2.msra.mxu0 0.0
        %974 = vmatprep.subr.mxu0 0.0
        %975 = vmatpush2.msra.mxu0 0.0
        %976 = vmatprep.subr.mxu0 0.0
        %977 = vmatpush2.msra.mxu0 0.0
        %978 = vmatprep.subr.mxu0 0.0
        %979 = vmatpush2.msra.mxu0 0.0
        %980 = vmatprep.subr.mxu0 0.0
        %981 = vmatpush2.msra.mxu0 0.0
        %982 = vmatprep.subr.mxu0 0.0
        %983 = vmatpush2.msra.mxu0 0.0
        %984 = vmatprep.subr.mxu0 0.0
        %985 = vmatpush2.msra.mxu0 0.0
        %986 = vmatprep.subr.mxu0 0.0
        %987 = vmatpush2.msra.mxu0 0.0
        %988 = vmatprep.subr.mxu0 0.0
        %989 = vmatpush2.msra.mxu0 0.0
        %990 = vmatprep.subr.mxu0 0.0
        %991 = vmatpush2.msra.mxu0 0.0
        %992 = vmatprep.mubr.f32.mxu0 0.0
        %993 = vmatmul.mubr.f32.gmra.mxu0 %v920
        %v994 = vpop.f32.mrf.mxu0
        %v995 = vadd.f32 0.0, %v994
        %v996 = vpop.f32.mrf.mxu0
        %v997 = vadd.f32 0.0, %v996
        %998 = vdwg.mxu0
        %v999 = vadd.f32 %v917, %v995
        %v1000 = vadd.f32 %v918, %v997
        %v1002 = vsel %vm429, %v426, 0
        %v1005 = vsel %vm433, %v390, 0
        %v1008 = vsel %vm433, %v391, 0
        %1010 = vmatprep.subr.mxu0 0.0
        %1011 = vmatpush1.msra.mxu0 0.0
        %1012 = vmatprep.subr.mxu0 0.0
        %1013 = vmatpush1.msra.mxu0 0.0
        %1014 = vmatprep.subr.mxu0 0.0
        %1015 = vmatpush1.msra.mxu0 0.0
        %1016 = vmatprep.subr.mxu0 0.0
        %1017 = vmatpush1.msra.mxu0 0.0
        %1018 = vmatprep.subr.mxu0 0.0
        %1019 = vmatpush1.msra.mxu0 0.0
        %1020 = vmatprep.subr.mxu0 0.0
        %1021 = vmatpush1.msra.mxu0 0.0
        %1022 = vmatprep.subr.mxu0 0.0
        %1023 = vmatpush1.msra.mxu0 0.0
        %1024 = vmatprep.subr.mxu0 0.0
        %1025 = vmatpush1.msra.mxu0 0.0
        %1026 = vmatprep.subr.mxu0 0.0
        %1027 = vmatpush1.msra.mxu0 0.0
        %1028 = vmatprep.subr.mxu0 0.0
        %1029 = vmatpush1.msra.mxu0 0.0
        %1030 = vmatprep.subr.mxu0 0.0
        %1031 = vmatpush1.msra.mxu0 0.0
        %1032 = vmatprep.subr.mxu0 0.0
        %1033 = vmatpush1.msra.mxu0 0.0
        %1034 = vmatprep.subr.mxu0 0.0
        %1035 = vmatpush1.msra.mxu0 0.0
        %1036 = vmatprep.subr.mxu0 0.0
        %1037 = vmatpush1.msra.mxu0 0.0
        %1038 = vmatprep.subr.mxu0 0.0
        %1039 = vmatpush1.msra.mxu0 0.0
        %1040 = vmatprep.subr.mxu0 %v1008
        %1041 = vmatpush1.msra.mxu0 %v1005
        %1042 = vmatprep.subr.mxu0 0.0
        %1043 = vmatpush2.msra.mxu0 0.0
        %1044 = vmatprep.subr.mxu0 0.0
        %1045 = vmatpush2.msra.mxu0 0.0
        %1046 = vmatprep.subr.mxu0 0.0
        %1047 = vmatpush2.msra.mxu0 0.0
        %1048 = vmatprep.subr.mxu0 0.0
        %1049 = vmatpush2.msra.mxu0 0.0
        %1050 = vmatprep.subr.mxu0 0.0
        %1051 = vmatpush2.msra.mxu0 0.0
        %1052 = vmatprep.subr.mxu0 0.0
        %1053 = vmatpush2.msra.mxu0 0.0
        %1054 = vmatprep.subr.mxu0 0.0
        %1055 = vmatpush2.msra.mxu0 0.0
        %1056 = vmatprep.subr.mxu0 0.0
        %1057 = vmatpush2.msra.mxu0 0.0
        %1058 = vmatprep.subr.mxu0 0.0
        %1059 = vmatpush2.msra.mxu0 0.0
        %1060 = vmatprep.subr.mxu0 0.0
        %1061 = vmatpush2.msra.mxu0 0.0
        %1062 = vmatprep.subr.mxu0 0.0
        %1063 = vmatpush2.msra.mxu0 0.0
        %1064 = vmatprep.subr.mxu0 0.0
        %1065 = vmatpush2.msra.mxu0 0.0
        %1066 = vmatprep.subr.mxu0 0.0
        %1067 = vmatpush2.msra.mxu0 0.0
        %1068 = vmatprep.subr.mxu0 0.0
        %1069 = vmatpush2.msra.mxu0 0.0
        %1070 = vmatprep.subr.mxu0 0.0
        %1071 = vmatpush2.msra.mxu0 0.0
        %1072 = vmatprep.subr.mxu0 0.0
        %1073 = vmatpush2.msra.mxu0 0.0
        %1074 = vmatprep.mubr.f32.mxu0 0.0
        %1075 = vmatmul.mubr.f32.gmra.mxu0 %v1002
        %v1076 = vpop.f32.mrf.mxu0
        %v1077 = vadd.f32 0.0, %v1076
        %v1078 = vpop.f32.mrf.mxu0
        %v1079 = vadd.f32 0.0, %v1078
        %1080 = vdwg.mxu0
        %v1081 = vadd.f32 %v999, %v1077
        %v1082 = vadd.f32 %v1000, %v1079
        %v1084 = vsel %vm429, %v428, 0
        %v1087 = vsel %vm433, %v407, 0
        %v1090 = vsel %vm433, %v408, 0
        %1092 = vmatprep.subr.mxu0 0.0
        %1093 = vmatpush1.msra.mxu0 0.0
        %1094 = vmatprep.subr.mxu0 0.0
        %1095 = vmatpush1.msra.mxu0 0.0
        %1096 = vmatprep.subr.mxu0 0.0
        %1097 = vmatpush1.msra.mxu0 0.0
        %1098 = vmatprep.subr.mxu0 0.0
        %1099 = vmatpush1.msra.mxu0 0.0
        %1100 = vmatprep.subr.mxu0 0.0
        %1101 = vmatpush1.msra.mxu0 0.0
        %1102 = vmatprep.subr.mxu0 0.0
        %1103 = vmatpush1.msra.mxu0 0.0
        %1104 = vmatprep.subr.mxu0 0.0
        %1105 = vmatpush1.msra.mxu0 0.0
        %1106 = vmatprep.subr.mxu0 0.0
        %1107 = vmatpush1.msra.mxu0 0.0
        %1108 = vmatprep.subr.mxu0 0.0
        %1109 = vmatpush1.msra.mxu0 0.0
        %1110 = vmatprep.subr.mxu0 0.0
        %1111 = vmatpush1.msra.mxu0 0.0
        %1112 = vmatprep.subr.mxu0 0.0
        %1113 = vmatpush1.msra.mxu0 0.0
        %1114 = vmatprep.subr.mxu0 0.0
        %1115 = vmatpush1.msra.mxu0 0.0
        %1116 = vmatprep.subr.mxu0 0.0
        %1117 = vmatpush1.msra.mxu0 0.0
        %1118 = vmatprep.subr.mxu0 0.0
        %1119 = vmatpush1.msra.mxu0 0.0
        %1120 = vmatprep.subr.mxu0 0.0
        %1121 = vmatpush1.msra.mxu0 0.0
        %1122 = vmatprep.subr.mxu0 %v1090
        %1123 = vmatpush1.msra.mxu0 %v1087
        %1124 = vmatprep.subr.mxu0 0.0
        %1125 = vmatpush2.msra.mxu0 0.0
        %1126 = vmatprep.subr.mxu0 0.0
        %1127 = vmatpush2.msra.mxu0 0.0
        %1128 = vmatprep.subr.mxu0 0.0
        %1129 = vmatpush2.msra.mxu0 0.0
        %1130 = vmatprep.subr.mxu0 0.0
        %1131 = vmatpush2.msra.mxu0 0.0
        %1132 = vmatprep.subr.mxu0 0.0
        %1133 = vmatpush2.msra.mxu0 0.0
        %1134 = vmatprep.subr.mxu0 0.0
        %1135 = vmatpush2.msra.mxu0 0.0
        %1136 = vmatprep.subr.mxu0 0.0
        %1137 = vmatpush2.msra.mxu0 0.0
        %1138 = vmatprep.subr.mxu0 0.0
        %1139 = vmatpush2.msra.mxu0 0.0
        %1140 = vmatprep.subr.mxu0 0.0
        %1141 = vmatpush2.msra.mxu0 0.0
        %1142 = vmatprep.subr.mxu0 0.0
        %1143 = vmatpush2.msra.mxu0 0.0
        %1144 = vmatprep.subr.mxu0 0.0
        %1145 = vmatpush2.msra.mxu0 0.0
        %1146 = vmatprep.subr.mxu0 0.0
        %1147 = vmatpush2.msra.mxu0 0.0
        %1148 = vmatprep.subr.mxu0 0.0
        %1149 = vmatpush2.msra.mxu0 0.0
        %1150 = vmatprep.subr.mxu0 0.0
        %1151 = vmatpush2.msra.mxu0 0.0
        %1152 = vmatprep.subr.mxu0 0.0
        %1153 = vmatpush2.msra.mxu0 0.0
        %1154 = vmatprep.subr.mxu0 0.0
        %1155 = vmatpush2.msra.mxu0 0.0
        %1156 = vmatprep.mubr.f32.mxu0 0.0
        %1157 = vmatmul.mubr.f32.gmra.mxu0 %v1084
        %v1158 = vpop.f32.mrf.mxu0
        %v1159 = vadd.f32 0.0, %v1158
        %v1160 = vpop.f32.mrf.mxu0
        %v1161 = vadd.f32 0.0, %v1160
        %1162 = vdwg.mxu0
        %v1163 = vadd.f32 %v1081, %v1159
        %v1164 = vadd.f32 %v1082, %v1161
        %1166 = vset.pattern.permute.xlu0 0
        %1167 = vperm.xlu0 %1166, %v409
        %v1168 = vpop.permute.xlu0 %1167
        %v1170 = vadd.f32 %v1163, %v1168
        %v1171 = vadd.f32 %v1164, %v1168
        %v1172 = vmax.f32 %v1170, 0.0
        %v1173 = vmax.f32 %v1171, 0.0
        %1175 = vset.pattern.permute.xlu0 0
        %1176 = vperm.xlu0 %1175, %v411
        %v1177 = vpop.permute.xlu0 %1176
        %v1180 = vsel %vm429, %v410, 0
        %v1183 = vsel %vm433, %v1172, 0
        %v1186 = vsel %vm433, %v1173, 0
        %1188 = vmatprep.subr.mxu0 0.0
        %1189 = vmatpush1.msra.mxu0 0.0
        %1190 = vmatprep.subr.mxu0 0.0
        %1191 = vmatpush1.msra.mxu0 0.0
        %1192 = vmatprep.subr.mxu0 0.0
        %1193 = vmatpush1.msra.mxu0 0.0
        %1194 = vmatprep.subr.mxu0 0.0
        %1195 = vmatpush1.msra.mxu0 0.0
        %1196 = vmatprep.subr.mxu0 0.0
        %1197 = vmatpush1.msra.mxu0 0.0
        %1198 = vmatprep.subr.mxu0 0.0
        %1199 = vmatpush1.msra.mxu0 0.0
        %1200 = vmatprep.subr.mxu0 0.0
        %1201 = vmatpush1.msra.mxu0 0.0
        %1202 = vmatprep.subr.mxu0 0.0
        %1203 = vmatpush1.msra.mxu0 0.0
        %1204 = vmatprep.subr.mxu0 0.0
        %1205 = vmatpush1.msra.mxu0 0.0
        %1206 = vmatprep.subr.mxu0 0.0
        %1207 = vmatpush1.msra.mxu0 0.0
        %1208 = vmatprep.subr.mxu0 0.0
        %1209 = vmatpush1.msra.mxu0 0.0
        %1210 = vmatprep.subr.mxu0 0.0
        %1211 = vmatpush1.msra.mxu0 0.0
        %1212 = vmatprep.subr.mxu0 0.0
        %1213 = vmatpush1.msra.mxu0 0.0
        %1214 = vmatprep.subr.mxu0 0.0
        %1215 = vmatpush1.msra.mxu0 0.0
        %1216 = vmatprep.subr.mxu0 0.0
        %1217 = vmatpush1.msra.mxu0 0.0
        %1218 = vmatprep.subr.mxu0 %v1186
        %1219 = vmatpush1.msra.mxu0 %v1183
        %1220 = vmatprep.subr.mxu0 0.0
        %1221 = vmatpush2.msra.mxu0 0.0
        %1222 = vmatprep.subr.mxu0 0.0
        %1223 = vmatpush2.msra.mxu0 0.0
        %1224 = vmatprep.subr.mxu0 0.0
        %1225 = vmatpush2.msra.mxu0 0.0
        %1226 = vmatprep.subr.mxu0 0.0
        %1227 = vmatpush2.msra.mxu0 0.0
        %1228 = vmatprep.subr.mxu0 0.0
        %1229 = vmatpush2.msra.mxu0 0.0
        %1230 = vmatprep.subr.mxu0 0.0
        %1231 = vmatpush2.msra.mxu0 0.0
        %1232 = vmatprep.subr.mxu0 0.0
        %1233 = vmatpush2.msra.mxu0 0.0
        %1234 = vmatprep.subr.mxu0 0.0
        %1235 = vmatpush2.msra.mxu0 0.0
        %1236 = vmatprep.subr.mxu0 0.0
        %1237 = vmatpush2.msra.mxu0 0.0
        %1238 = vmatprep.subr.mxu0 0.0
        %1239 = vmatpush2.msra.mxu0 0.0
        %1240 = vmatprep.subr.mxu0 0.0
        %1241 = vmatpush2.msra.mxu0 0.0
        %1242 = vmatprep.subr.mxu0 0.0
        %1243 = vmatpush2.msra.mxu0 0.0
        %1244 = vmatprep.subr.mxu0 0.0
        %1245 = vmatpush2.msra.mxu0 0.0
        %1246 = vmatprep.subr.mxu0 0.0
        %1247 = vmatpush2.msra.mxu0 0.0
        %1248 = vmatprep.subr.mxu0 0.0
        %1249 = vmatpush2.msra.mxu0 0.0
        %1250 = vmatprep.subr.mxu0 0.0
        %1251 = vmatpush2.msra.mxu0 0.0
        %1252 = vmatprep.mubr.f32.mxu0 0.0
        %1253 = vmatmul.mubr.f32.gmra.mxu0 %v1180
        %v1254 = vpop.f32.mrf.mxu0
        %v1255 = vadd.f32 %v1177, %v1254
        %v1256 = vpop.f32.mrf.mxu0
        %v1257 = vadd.f32 %v1177, %v1256
        %1258 = vdwg.mxu0
        %1259 = vst [vmem:[%s244] sm:$0xff] %v1255
        %1260 = vst [vmem:[%s244 + $0x8] sm:$0xff] %v1257
        %s1261 = sand.u32 %s159, 1
        %s1262 = scalar_lea.sflag [#allocation3], %s1261
        %s1263 = sand.u32 %s159, 1
        %s1264 = smul.addr %s1263, 16
        %s1265 = scalar_lea.vmem [#allocation2], %s1264
        // Predicated region
        $region45: #{tpu_custom_call.1} parent=43 // pred_check
          %p1266 = pneg %p169
        $region46: #{tpu_custom_call.1} parent=43 // pred_check_branch
          %1268 = sbr.rel (%p1266) target = $region48
        $region47: #{tpu_custom_call.1} parent=43 // pred_region
          %s1270 = ssub.s32 256, 256
          %1271 = vsyncadd %s1262, %s1270
          %s1272 = smul.addr %s20, 2
          %s1273 = smul.addr %s1272, 128
          %s1274 = scalar_lea.hbm %s6, %s1273
          %s1276 = sshll.u32 %s1265, 4
          %s1277 = int_to_ptr.vmem [resolvable:$true] %s1276
          %1279 = dma.vmem_to_hbm [thread:$0]  %s1277, 256, %s1274, %s1262
        $region48: #{tpu_custom_call.1} parent=43 // pred_fallthru
          _
      $region44: #{tpu_custom_call.1} parent=5 // pred_fallthru
        _
      %p1280 = scmp.le.s32.totalorder 2, %s15
      // Predicated region
      $region49: #{tpu_custom_call.1} parent=5 // pred_check
        %p1281 = pneg %p1280
      $region50: #{tpu_custom_call.1} parent=5 // pred_check_branch
        %1283 = sbr.rel (%p1281) target = $region52
      $region51: #{tpu_custom_call.1} parent=5 // pred_region
        %s1284 = ssub.s32 %s15, 2
        // Predicated region
        $region53: #{tpu_custom_call.1} parent=51 // pred_check
          %p1285 = pneg %p175
        $region54: #{tpu_custom_call.1} parent=51 // pred_check_branch
          %1287 = sbr.rel (%p1285) target = $region56
        $region55: #{tpu_custom_call.1} parent=51 // pred_region
          %s1288 = sand.u32 %s160, 1
          %s1289 = scalar_lea.sflag [#allocation3], %s1288
          %s1290 = sand.u32 %s160, 1
          %s1291 = smul.addr %s1290, 16
          %s1292 = scalar_lea.vmem [#allocation2], %s1291
          %1293 = dma.done %s1289, 256
        $region56: #{tpu_custom_call.1} parent=51 // pred_fallthru
          _
      $region52: #{tpu_custom_call.1} parent=5 // pred_fallthru
        _
    $region6: #{tpu_custom_call.1} parent=1 // loop_footer
      %s19 = sadd.s32 1, %s15
    $region7: #{tpu_custom_call.1} parent=1 // loop_footer_branch
      %14 = sbr.rel target = $region3
    $region8: #{tpu_custom_call.1} parent=1 // loop_exit
      _
    %1294 = vsyncpa [#allocation3], 1
    %s1295 = scalar_lea.sflag [#allocation3], 1
    %1296 = vsyncpa %s1295, 1

</llo_original>
